<compile_context>
chip_gen: v7x
topology: tpu7x:2x2x1
jax: 0.10.0
libtpu: 0.0.40
codegen_flags: <defaults>
</compile_context>

<pallas_src>
import jax
import jax.numpy as jnp
from jax.experimental import pallas as pl
from jax.experimental.pallas import tpu as pltpu

EPS = 1e-3


def conv_bn_kernel(x_ref, w_ref, gamma_ref, beta_ref, o_ref):
    # x_ref:     (Cin, M)   VMEM   -- channel-major input (free reshape of NCHW, N=1)
    # w_ref:     (Cout, Cin) VMEM  -- PyTorch Conv2d 1x1 weight layout, untransposed
    # gamma_ref: (Cout, 1)  VMEM
    # beta_ref:  (Cout, 1)  VMEM
    # o_ref:     (Cout, M)  VMEM   -- reshapes for free back to (1, Cout, H, W)
    x = x_ref[...]
    w = w_ref[...]

    # 1x1 convolution == matmul over the channel axis (MXU), channel-major output.
    y = jnp.dot(w, x, preferred_element_type=jnp.float32)  # (Cout, M)

    m = x_ref.shape[1]                  # true M = N*H*W (static)
    inv_m = jnp.float32(1.0 / m)

    # Training-mode BatchNorm2d (biased variance over N*H*W), one-pass stats.
    s1 = jnp.sum(y, axis=1, keepdims=True)                  # (Cout, 1)
    s2 = jnp.sum(y * y, axis=1, keepdims=True)              # (Cout, 1)
    mean = s1 * inv_m
    var = s2 * inv_m - mean * mean

    scale = gamma_ref[...] * jax.lax.rsqrt(var + EPS)        # (Cout, 1)
    bias = beta_ref[...] - mean * scale                      # (Cout, 1)

    o_ref[...] = y * scale + bias


def conv2d_batchnorm(x_nchw, weight_oi, gamma, beta):
    """x_nchw: (1, Cin, H, W); weight_oi: (Cout, Cin); gamma/beta: (Cout,)"""
    N, Cin, H, W = x_nchw.shape
    Cout = weight_oi.shape[0]
    assert N == 1, "channel-major layout trick (free reshape) assumes N == 1"
    M = N * H * W

    # All of these are free (pure dim collapse / tiny arrays); no HBM transposes.
    x_cm = x_nchw.reshape(Cin, M).astype(jnp.float32)        # (Cin, M)
    w = weight_oi.astype(jnp.float32)                        # (Cout, Cin)
    g = gamma.reshape(Cout, 1).astype(jnp.float32)
    b = beta.reshape(Cout, 1).astype(jnp.float32)

    vmem = pl.BlockSpec(memory_space=pltpu.MemorySpace.VMEM)
    cost = pl.CostEstimate(
        flops=2 * M * Cin * Cout,
        transcendentals=Cout,
        bytes_accessed=4 * (Cin * M + Cout * Cin + Cout * M + 2 * Cout),
    )

    out_cm = pl.pallas_call(
        conv_bn_kernel,
        out_shape=jax.ShapeDtypeStruct((Cout, M), jnp.float32),
        in_specs=[vmem, vmem, vmem, vmem],
        out_specs=vmem,
        cost_estimate=cost,
    )(x_cm, w, g, b)

    # (Cout, M) -> (1, Cout, H, W): free reshape (contiguous).
    return out_cm.reshape(N, Cout, H, W)


if __name__ == "__main__":
    key = jax.random.PRNGKey(0)
    k_x, k_w, k_g, k_b = jax.random.split(key, 4)

    N, Cin, H, W, Cout = 1, 1200, 14, 14, 200

    x = jax.random.normal(k_x, (N, Cin, H, W), dtype=jnp.float32)
    # Deterministic parameter init (synthetic; matches module shapes).
    weight = jax.random.normal(k_w, (Cout, Cin), dtype=jnp.float32) * 0.02  # Conv2d 1x1 weight
    gamma = 1.0 + 0.1 * jax.random.normal(k_g, (Cout,), dtype=jnp.float32)  # BN weight
    beta = 0.1 * jax.random.normal(k_b, (Cout,), dtype=jnp.float32)         # BN bias

    y = conv2d_batchnorm(x, weight, gamma, beta)
    jax.block_until_ready(y)

    # Independent reference in plain JAX (row-major layout, two-pass BN).
    x_mat = jnp.transpose(x, (0, 2, 3, 1)).reshape(N * H * W, Cin)
    y_ref = x_mat @ weight.T
    mu = jnp.mean(y_ref, axis=0, keepdims=True)
    var = jnp.mean((y_ref - mu) ** 2, axis=0, keepdims=True)
    y_ref = (y_ref - mu) * jax.lax.rsqrt(var + EPS) * gamma[None, :] + beta[None, :]
    y_ref = jnp.transpose(y_ref.reshape(N, H, W, Cout), (0, 3, 1, 2))

    assert y.shape == (N, Cout, H, W), y.shape
    assert jnp.allclose(y, y_ref, atol=1e-3, rtol=1e-3), float(jnp.max(jnp.abs(y - y_ref)))

    print("KERNEL_OK")
</pallas_src>

<mosaic_0001>
module attributes {stable_mosaic.version = 11 : i64} {
  func.func @conv_bn_kernel(%arg0: memref<1200x196xf32, #tpu.memory_space<vmem>>, %arg1: memref<200x1200xf32, #tpu.memory_space<vmem>>, %arg2: memref<200x1xf32, #tpu.memory_space<vmem>>, %arg3: memref<200x1xf32, #tpu.memory_space<vmem>>, %arg4: memref<200x196xf32, #tpu.memory_space<vmem>>) attributes {dimension_semantics = [], scalar_prefetch = 0 : i64, scratch_operands = 0 : i64, tpu.core_type = #tpu.core_type<tc>} {
    %c0 = arith.constant 0 : index
    %c0_0 = arith.constant 0 : index
    %0 = vector.load %arg0[%c0, %c0_0] : memref<1200x196xf32, #tpu.memory_space<vmem>>, vector<1200x196xf32>
    %c0_1 = arith.constant 0 : index
    %c0_2 = arith.constant 0 : index
    %1 = vector.load %arg1[%c0_1, %c0_2] : memref<200x1200xf32, #tpu.memory_space<vmem>>, vector<200x1200xf32>
    %cst = arith.constant dense<0.000000e+00> : vector<200x196xf32>
    %2 = tpu.matmul %1, %0, %cst {dimension_numbers = #tpu.dot_dimension_numbers<[1], [0], [0], [1], [0, 0, 1, 1], [], []>} : vector<200x1200xf32>, vector<1200x196xf32>, vector<200x196xf32> -> vector<200x196xf32>
    %cst_3 = arith.constant dense<0.000000e+00> : vector<200xf32>
    %3 = vector.multi_reduction <add>, %2, %cst_3 [1] : vector<200x196xf32> to vector<200xf32>
    %4 = vector.shape_cast %3 : vector<200xf32> to vector<200x1xf32>
    %5 = arith.mulf %2, %2 : vector<200x196xf32>
    %cst_4 = arith.constant dense<0.000000e+00> : vector<200xf32>
    %6 = vector.multi_reduction <add>, %5, %cst_4 [1] : vector<200x196xf32> to vector<200xf32>
    %7 = vector.shape_cast %6 : vector<200xf32> to vector<200x1xf32>
    %cst_5 = arith.constant 0.00510204071 : f32
    %8 = vector.broadcast %cst_5 : f32 to vector<200x1xf32>
    %9 = arith.mulf %4, %8 : vector<200x1xf32>
    %cst_6 = arith.constant 0.00510204071 : f32
    %10 = vector.broadcast %cst_6 : f32 to vector<200x1xf32>
    %11 = arith.mulf %7, %10 : vector<200x1xf32>
    %12 = arith.mulf %9, %9 : vector<200x1xf32>
    %13 = arith.subf %11, %12 : vector<200x1xf32>
    %c0_7 = arith.constant 0 : index
    %c0_8 = arith.constant 0 : index
    %14 = vector.load %arg2[%c0_7, %c0_8] : memref<200x1xf32, #tpu.memory_space<vmem>>, vector<200x1xf32>
    %cst_9 = arith.constant 1.000000e-03 : f32
    %15 = vector.broadcast %cst_9 : f32 to vector<200x1xf32>
    %16 = arith.addf %13, %15 : vector<200x1xf32>
    %17 = math.rsqrt %16 : vector<200x1xf32>
    %18 = arith.mulf %14, %17 : vector<200x1xf32>
    %c0_10 = arith.constant 0 : index
    %c0_11 = arith.constant 0 : index
    %19 = vector.load %arg3[%c0_10, %c0_11] : memref<200x1xf32, #tpu.memory_space<vmem>>, vector<200x1xf32>
    %20 = arith.mulf %9, %18 : vector<200x1xf32>
    %21 = arith.subf %19, %20 : vector<200x1xf32>
    %22 = vector.broadcast %18 : vector<200x1xf32> to vector<200x196xf32>
    %23 = arith.mulf %2, %22 : vector<200x196xf32>
    %24 = vector.broadcast %21 : vector<200x1xf32> to vector<200x196xf32>
    %25 = arith.addf %23, %24 : vector<200x196xf32>
    %c0_12 = arith.constant 0 : index
    %c0_13 = arith.constant 0 : index
    %26 = vector.load %arg4[%c0_12, %c0_13] : memref<200x196xf32, #tpu.memory_space<vmem>>, vector<200x196xf32>
    tpu.vector_store %arg4[%c0_12, %c0_13], %25 {strides = array<i32>} : memref<200x196xf32, #tpu.memory_space<vmem>>, vector<200x196xf32>,
    return
  }
}

</mosaic_0001>

<llo_original>
// kernel: tpu_custom_call.1
$region0: #{tpu_custom_call.1}
  #allocation0 [shape = 'u32[]', space=smem, size = 0x4, offset = 0x4, fixed_abs, tag = 'smem constant byte address 0x4 - core index']
  #allocation1 [shape = 'u32[144,128]{1,0:T(1,128)}', space=vmem, size = 0x12000, scoped, tag = 'internal scratch']
  %s0 = inlined_call_operand.vmem [shape: f32[1200,196], index: 0, kind: input, shape index: {}]
  %s1 = inlined_call_operand.vmem [shape: f32[200,1200], index: 1, kind: input, shape index: {}]
  %s2 = inlined_call_operand.vmem [shape: f32[200,1], index: 2, kind: input, shape index: {}]
  %s3 = inlined_call_operand.vmem [shape: f32[200,1], index: 3, kind: input, shape index: {}]
  %s4 = inlined_call_operand.hbm [shape: f32[200,196], index: 4, kind: output, shape index: {}]
  %s5 = sld [smem:[#allocation0]]
  $region26: #{tpu_custom_call.1} parent=0
    _
  %s7 = ssub.s32 1, %s5
  %s8 = scalar_select 0, %s7, %s5
  $region1: #{tpu_custom_call.1} parent=0
    #allocation2 [shape = 'u8[204800]{0}', space=vmem, size = 0x32000, scoped, tag = 'output window, operand 0, single buffered']
    #allocation3 [shape = 's32[1]{0}', space=sflag, size = 0x4, scoped, tag = 'scoped memory for tpu_custom_call.1']
    %9 = vsyncpa [#allocation3], 0
    // Predicated region
    $region2: #{tpu_custom_call.1} parent=1 // pred_check
      _
    $region3: #{tpu_custom_call.1} parent=1 // pred_check_branch
      %11 = sbr.rel (0) target = $region5
    $region4: #{tpu_custom_call.1} parent=1 // pred_region
      _
    $region5: #{tpu_custom_call.1} parent=1 // pred_fallthru
      _
    // Predicated region
    $region6: #{tpu_custom_call.1} parent=1 // pred_check
      _
    $region7: #{tpu_custom_call.1} parent=1 // pred_check_branch
      %13 = sbr.rel (0) target = $region9
    $region8: #{tpu_custom_call.1} parent=1 // pred_region
      _
    $region9: #{tpu_custom_call.1} parent=1 // pred_fallthru
      _
    // Predicated region
    $region10: #{tpu_custom_call.1} parent=1 // pred_check
      _
    $region11: #{tpu_custom_call.1} parent=1 // pred_check_branch
      %15 = sbr.rel (0) target = $region13
    $region12: #{tpu_custom_call.1} parent=1 // pred_region
      _
    $region13: #{tpu_custom_call.1} parent=1 // pred_fallthru
      _
    // Predicated region
    $region14: #{tpu_custom_call.1} parent=1 // pred_check
      _
    $region15: #{tpu_custom_call.1} parent=1 // pred_check_branch
      %17 = sbr.rel (0) target = $region17
    $region16: #{tpu_custom_call.1} parent=1 // pred_region
      _
    $region17: #{tpu_custom_call.1} parent=1 // pred_fallthru
      _
    %v18 = vld [vmem:[%s0] sm:$0xff]
    %v19 = vld [vmem:[%s0 + $0x8] sm:$0xff]
    %v20 = vld [vmem:[%s0 + $0x10] sm:$0xff]
    %v21 = vld [vmem:[%s0 + $0x18] sm:$0xff]
    %v22 = vld [vmem:[%s0 + $0x20] sm:$0xff]
    %v23 = vld [vmem:[%s0 + $0x28] sm:$0xff]
    %v24 = vld [vmem:[%s0 + $0x30] sm:$0xff]
    %v25 = vld [vmem:[%s0 + $0x38] sm:$0xff]
    %v26 = vld [vmem:[%s0 + $0x40] sm:$0xff]
    %v27 = vld [vmem:[%s0 + $0x48] sm:$0xff]
    %v28 = vld [vmem:[%s0 + $0x50] sm:$0xff]
    %v29 = vld [vmem:[%s0 + $0x58] sm:$0xff]
    %v30 = vld [vmem:[%s0 + $0x60] sm:$0xff]
    %v31 = vld [vmem:[%s0 + $0x68] sm:$0xff]
    %v32 = vld [vmem:[%s0 + $0x70] sm:$0xff]
    %v33 = vld [vmem:[%s0 + $0x78] sm:$0xff]
    %v34 = vld [vmem:[%s0 + $0x80] sm:$0xff]
    %v35 = vld [vmem:[%s0 + $0x88] sm:$0xff]
    %v36 = vld [vmem:[%s0 + $0x90] sm:$0xff]
    %v37 = vld [vmem:[%s0 + $0x98] sm:$0xff]
    %v38 = vld [vmem:[%s0 + $0xa0] sm:$0xff]
    %v39 = vld [vmem:[%s0 + $0xa8] sm:$0xff]
    %v40 = vld [vmem:[%s0 + $0xb0] sm:$0xff]
    %v41 = vld [vmem:[%s0 + $0xb8] sm:$0xff]
    %v42 = vld [vmem:[%s0 + $0xc0] sm:$0xff]
    %v43 = vld [vmem:[%s0 + $0xc8] sm:$0xff]
    %v44 = vld [vmem:[%s0 + $0xd0] sm:$0xff]
    %v45 = vld [vmem:[%s0 + $0xd8] sm:$0xff]
    %v46 = vld [vmem:[%s0 + $0xe0] sm:$0xff]
    %v47 = vld [vmem:[%s0 + $0xe8] sm:$0xff]
    %v48 = vld [vmem:[%s0 + $0xf0] sm:$0xff]
    %v49 = vld [vmem:[%s0 + $0xf8] sm:$0xff]
    %v50 = vld [vmem:[%s0 + $0x100] sm:$0xff]
    %v51 = vld [vmem:[%s0 + $0x108] sm:$0xff]
    %v52 = vld [vmem:[%s0 + $0x110] sm:$0xff]
    %v53 = vld [vmem:[%s0 + $0x118] sm:$0xff]
    %v54 = vld [vmem:[%s0 + $0x120] sm:$0xff]
    %v55 = vld [vmem:[%s0 + $0x128] sm:$0xff]
    %v56 = vld [vmem:[%s0 + $0x130] sm:$0xff]
    %v57 = vld [vmem:[%s0 + $0x138] sm:$0xff]
    %v58 = vld [vmem:[%s0 + $0x140] sm:$0xff]
    %v59 = vld [vmem:[%s0 + $0x148] sm:$0xff]
    %v60 = vld [vmem:[%s0 + $0x150] sm:$0xff]
    %v61 = vld [vmem:[%s0 + $0x158] sm:$0xff]
    %v62 = vld [vmem:[%s0 + $0x160] sm:$0xff]
    %v63 = vld [vmem:[%s0 + $0x168] sm:$0xff]
    %v64 = vld [vmem:[%s0 + $0x170] sm:$0xff]
    %v65 = vld [vmem:[%s0 + $0x178] sm:$0xff]
    %v66 = vld [vmem:[%s0 + $0x180] sm:$0xff]
    %v67 = vld [vmem:[%s0 + $0x188] sm:$0xff]
    %v68 = vld [vmem:[%s0 + $0x190] sm:$0xff]
    %v69 = vld [vmem:[%s0 + $0x198] sm:$0xff]
    %v70 = vld [vmem:[%s0 + $0x1a0] sm:$0xff]
    %v71 = vld [vmem:[%s0 + $0x1a8] sm:$0xff]
    %v72 = vld [vmem:[%s0 + $0x1b0] sm:$0xff]
    %v73 = vld [vmem:[%s0 + $0x1b8] sm:$0xff]
    %v74 = vld [vmem:[%s0 + $0x1c0] sm:$0xff]
    %v75 = vld [vmem:[%s0 + $0x1c8] sm:$0xff]
    %v76 = vld [vmem:[%s0 + $0x1d0] sm:$0xff]
    %v77 = vld [vmem:[%s0 + $0x1d8] sm:$0xff]
    %v78 = vld [vmem:[%s0 + $0x1e0] sm:$0xff]
    %v79 = vld [vmem:[%s0 + $0x1e8] sm:$0xff]
    %v80 = vld [vmem:[%s0 + $0x1f0] sm:$0xff]
    %v81 = vld [vmem:[%s0 + $0x1f8] sm:$0xff]
    %v82 = vld [vmem:[%s0 + $0x200] sm:$0xff]
    %v83 = vld [vmem:[%s0 + $0x208] sm:$0xff]
    %v84 = vld [vmem:[%s0 + $0x210] sm:$0xff]
    %v85 = vld [vmem:[%s0 + $0x218] sm:$0xff]
    %v86 = vld [vmem:[%s0 + $0x220] sm:$0xff]
    %v87 = vld [vmem:[%s0 + $0x228] sm:$0xff]
    %v88 = vld [vmem:[%s0 + $0x230] sm:$0xff]
    %v89 = vld [vmem:[%s0 + $0x238] sm:$0xff]
    %v90 = vld [vmem:[%s0 + $0x240] sm:$0xff]
    %v91 = vld [vmem:[%s0 + $0x248] sm:$0xff]
    %v92 = vld [vmem:[%s0 + $0x250] sm:$0xff]
    %v93 = vld [vmem:[%s0 + $0x258] sm:$0xff]
    %v94 = vld [vmem:[%s0 + $0x260] sm:$0xff]
    %v95 = vld [vmem:[%s0 + $0x268] sm:$0xff]
    %v96 = vld [vmem:[%s0 + $0x270] sm:$0xff]
    %v97 = vld [vmem:[%s0 + $0x278] sm:$0xff]
    %v98 = vld [vmem:[%s0 + $0x280] sm:$0xff]
    %v99 = vld [vmem:[%s0 + $0x288] sm:$0xff]
    %v100 = vld [vmem:[%s0 + $0x290] sm:$0xff]
    %v101 = vld [vmem:[%s0 + $0x298] sm:$0xff]
    %v102 = vld [vmem:[%s0 + $0x2a0] sm:$0xff]
    %v103 = vld [vmem:[%s0 + $0x2a8] sm:$0xff]
    %v104 = vld [vmem:[%s0 + $0x2b0] sm:$0xff]
    %v105 = vld [vmem:[%s0 + $0x2b8] sm:$0xff]
    %v106 = vld [vmem:[%s0 + $0x2c0] sm:$0xff]
    %v107 = vld [vmem:[%s0 + $0x2c8] sm:$0xff]
    %v108 = vld [vmem:[%s0 + $0x2d0] sm:$0xff]
    %v109 = vld [vmem:[%s0 + $0x2d8] sm:$0xff]
    %v110 = vld [vmem:[%s0 + $0x2e0] sm:$0xff]
    %v111 = vld [vmem:[%s0 + $0x2e8] sm:$0xff]
    %v112 = vld [vmem:[%s0 + $0x2f0] sm:$0xff]
    %v113 = vld [vmem:[%s0 + $0x2f8] sm:$0xff]
    %v114 = vld [vmem:[%s0 + $0x300] sm:$0xff]
    %v115 = vld [vmem:[%s0 + $0x308] sm:$0xff]
    %v116 = vld [vmem:[%s0 + $0x310] sm:$0xff]
    %v117 = vld [vmem:[%s0 + $0x318] sm:$0xff]
    %v118 = vld [vmem:[%s0 + $0x320] sm:$0xff]
    %v119 = vld [vmem:[%s0 + $0x328] sm:$0xff]
    %v120 = vld [vmem:[%s0 + $0x330] sm:$0xff]
    %v121 = vld [vmem:[%s0 + $0x338] sm:$0xff]
    %v122 = vld [vmem:[%s0 + $0x340] sm:$0xff]
    %v123 = vld [vmem:[%s0 + $0x348] sm:$0xff]
    %v124 = vld [vmem:[%s0 + $0x350] sm:$0xff]
    %v125 = vld [vmem:[%s0 + $0x358] sm:$0xff]
    %v126 = vld [vmem:[%s0 + $0x360] sm:$0xff]
    %v127 = vld [vmem:[%s0 + $0x368] sm:$0xff]
    %v128 = vld [vmem:[%s0 + $0x370] sm:$0xff]
    %v129 = vld [vmem:[%s0 + $0x378] sm:$0xff]
    %v130 = vld [vmem:[%s0 + $0x380] sm:$0xff]
    %v131 = vld [vmem:[%s0 + $0x388] sm:$0xff]
    %v132 = vld [vmem:[%s0 + $0x390] sm:$0xff]
    %v133 = vld [vmem:[%s0 + $0x398] sm:$0xff]
    %v134 = vld [vmem:[%s0 + $0x3a0] sm:$0xff]
    %v135 = vld [vmem:[%s0 + $0x3a8] sm:$0xff]
    %v136 = vld [vmem:[%s0 + $0x3b0] sm:$0xff]
    %v137 = vld [vmem:[%s0 + $0x3b8] sm:$0xff]
    %v138 = vld [vmem:[%s0 + $0x3c0] sm:$0xff]
    %v139 = vld [vmem:[%s0 + $0x3c8] sm:$0xff]
    %v140 = vld [vmem:[%s0 + $0x3d0] sm:$0xff]
    %v141 = vld [vmem:[%s0 + $0x3d8] sm:$0xff]
    %v142 = vld [vmem:[%s0 + $0x3e0] sm:$0xff]
    %v143 = vld [vmem:[%s0 + $0x3e8] sm:$0xff]
    %v144 = vld [vmem:[%s0 + $0x3f0] sm:$0xff]
    %v145 = vld [vmem:[%s0 + $0x3f8] sm:$0xff]
    %v146 = vld [vmem:[%s0 + $0x400] sm:$0xff]
    %v147 = vld [vmem:[%s0 + $0x408] sm:$0xff]
    %v148 = vld [vmem:[%s0 + $0x410] sm:$0xff]
    %v149 = vld [vmem:[%s0 + $0x418] sm:$0xff]
    %v150 = vld [vmem:[%s0 + $0x420] sm:$0xff]
    %v151 = vld [vmem:[%s0 + $0x428] sm:$0xff]
    %v152 = vld [vmem:[%s0 + $0x430] sm:$0xff]
    %v153 = vld [vmem:[%s0 + $0x438] sm:$0xff]
    %v154 = vld [vmem:[%s0 + $0x440] sm:$0xff]
    %v155 = vld [vmem:[%s0 + $0x448] sm:$0xff]
    %v156 = vld [vmem:[%s0 + $0x450] sm:$0xff]
    %v157 = vld [vmem:[%s0 + $0x458] sm:$0xff]
    %v158 = vld [vmem:[%s0 + $0x460] sm:$0xff]
    %v159 = vld [vmem:[%s0 + $0x468] sm:$0xff]
    %v160 = vld [vmem:[%s0 + $0x470] sm:$0xff]
    %v161 = vld [vmem:[%s0 + $0x478] sm:$0xff]
    %v162 = vld [vmem:[%s0 + $0x480] sm:$0xff]
    %v163 = vld [vmem:[%s0 + $0x488] sm:$0xff]
    %v164 = vld [vmem:[%s0 + $0x490] sm:$0xff]
    %v165 = vld [vmem:[%s0 + $0x498] sm:$0xff]
    %v166 = vld [vmem:[%s0 + $0x4a0] sm:$0xff]
    %v167 = vld [vmem:[%s0 + $0x4a8] sm:$0xff]
    %v168 = vld [vmem:[%s0 + $0x4b0] sm:$0xff]
    %v169 = vld [vmem:[%s0 + $0x4b8] sm:$0xff]
    %v170 = vld [vmem:[%s0 + $0x4c0] sm:$0xff]
    %v171 = vld [vmem:[%s0 + $0x4c8] sm:$0xff]
    %v172 = vld [vmem:[%s0 + $0x4d0] sm:$0xff]
    %v173 = vld [vmem:[%s0 + $0x4d8] sm:$0xff]
    %v174 = vld [vmem:[%s0 + $0x4e0] sm:$0xff]
    %v175 = vld [vmem:[%s0 + $0x4e8] sm:$0xff]
    %v176 = vld [vmem:[%s0 + $0x4f0] sm:$0xff]
    %v177 = vld [vmem:[%s0 + $0x4f8] sm:$0xff]
    %v178 = vld [vmem:[%s0 + $0x500] sm:$0xff]
    %v179 = vld [vmem:[%s0 + $0x508] sm:$0xff]
    %v180 = vld [vmem:[%s0 + $0x510] sm:$0xff]
    %v181 = vld [vmem:[%s0 + $0x518] sm:$0xff]
    %v182 = vld [vmem:[%s0 + $0x520] sm:$0xff]
    %v183 = vld [vmem:[%s0 + $0x528] sm:$0xff]
    %v184 = vld [vmem:[%s0 + $0x530] sm:$0xff]
    %v185 = vld [vmem:[%s0 + $0x538] sm:$0xff]
    %v186 = vld [vmem:[%s0 + $0x540] sm:$0xff]
    %v187 = vld [vmem:[%s0 + $0x548] sm:$0xff]
    %v188 = vld [vmem:[%s0 + $0x550] sm:$0xff]
    %v189 = vld [vmem:[%s0 + $0x558] sm:$0xff]
    %v190 = vld [vmem:[%s0 + $0x560] sm:$0xff]
    %v191 = vld [vmem:[%s0 + $0x568] sm:$0xff]
    %v192 = vld [vmem:[%s0 + $0x570] sm:$0xff]
    %v193 = vld [vmem:[%s0 + $0x578] sm:$0xff]
    %v194 = vld [vmem:[%s0 + $0x580] sm:$0xff]
    %v195 = vld [vmem:[%s0 + $0x588] sm:$0xff]
    %v196 = vld [vmem:[%s0 + $0x590] sm:$0xff]
    %v197 = vld [vmem:[%s0 + $0x598] sm:$0xff]
    %v198 = vld [vmem:[%s0 + $0x5a0] sm:$0xff]
    %v199 = vld [vmem:[%s0 + $0x5a8] sm:$0xff]
    %v200 = vld [vmem:[%s0 + $0x5b0] sm:$0xff]
    %v201 = vld [vmem:[%s0 + $0x5b8] sm:$0xff]
    %v202 = vld [vmem:[%s0 + $0x5c0] sm:$0xff]
    %v203 = vld [vmem:[%s0 + $0x5c8] sm:$0xff]
    %v204 = vld [vmem:[%s0 + $0x5d0] sm:$0xff]
    %v205 = vld [vmem:[%s0 + $0x5d8] sm:$0xff]
    %v206 = vld [vmem:[%s0 + $0x5e0] sm:$0xff]
    %v207 = vld [vmem:[%s0 + $0x5e8] sm:$0xff]
    %v208 = vld [vmem:[%s0 + $0x5f0] sm:$0xff]
    %v209 = vld [vmem:[%s0 + $0x5f8] sm:$0xff]
    %v210 = vld [vmem:[%s0 + $0x600] sm:$0xff]
    %v211 = vld [vmem:[%s0 + $0x608] sm:$0xff]
    %v212 = vld [vmem:[%s0 + $0x610] sm:$0xff]
    %v213 = vld [vmem:[%s0 + $0x618] sm:$0xff]
    %v214 = vld [vmem:[%s0 + $0x620] sm:$0xff]
    %v215 = vld [vmem:[%s0 + $0x628] sm:$0xff]
    %v216 = vld [vmem:[%s0 + $0x630] sm:$0xff]
    %v217 = vld [vmem:[%s0 + $0x638] sm:$0xff]
    %v218 = vld [vmem:[%s0 + $0x640] sm:$0xff]
    %v219 = vld [vmem:[%s0 + $0x648] sm:$0xff]
    %v220 = vld [vmem:[%s0 + $0x650] sm:$0xff]
    %v221 = vld [vmem:[%s0 + $0x658] sm:$0xff]
    %v222 = vld [vmem:[%s0 + $0x660] sm:$0xff]
    %v223 = vld [vmem:[%s0 + $0x668] sm:$0xff]
    %v224 = vld [vmem:[%s0 + $0x670] sm:$0xff]
    %v225 = vld [vmem:[%s0 + $0x678] sm:$0xff]
    %v226 = vld [vmem:[%s0 + $0x680] sm:$0xff]
    %v227 = vld [vmem:[%s0 + $0x688] sm:$0xff]
    %v228 = vld [vmem:[%s0 + $0x690] sm:$0xff]
    %v229 = vld [vmem:[%s0 + $0x698] sm:$0xff]
    %v230 = vld [vmem:[%s0 + $0x6a0] sm:$0xff]
    %v231 = vld [vmem:[%s0 + $0x6a8] sm:$0xff]
    %v232 = vld [vmem:[%s0 + $0x6b0] sm:$0xff]
    %v233 = vld [vmem:[%s0 + $0x6b8] sm:$0xff]
    %v234 = vld [vmem:[%s0 + $0x6c0] sm:$0xff]
    %v235 = vld [vmem:[%s0 + $0x6c8] sm:$0xff]
    %v236 = vld [vmem:[%s0 + $0x6d0] sm:$0xff]
    %v237 = vld [vmem:[%s0 + $0x6d8] sm:$0xff]
    %v238 = vld [vmem:[%s0 + $0x6e0] sm:$0xff]
    %v239 = vld [vmem:[%s0 + $0x6e8] sm:$0xff]
    %v240 = vld [vmem:[%s0 + $0x6f0] sm:$0xff]
    %v241 = vld [vmem:[%s0 + $0x6f8] sm:$0xff]
    %v242 = vld [vmem:[%s0 + $0x700] sm:$0xff]
    %v243 = vld [vmem:[%s0 + $0x708] sm:$0xff]
    %v244 = vld [vmem:[%s0 + $0x710] sm:$0xff]
    %v245 = vld [vmem:[%s0 + $0x718] sm:$0xff]
    %v246 = vld [vmem:[%s0 + $0x720] sm:$0xff]
    %v247 = vld [vmem:[%s0 + $0x728] sm:$0xff]
    %v248 = vld [vmem:[%s0 + $0x730] sm:$0xff]
    %v249 = vld [vmem:[%s0 + $0x738] sm:$0xff]
    %v250 = vld [vmem:[%s0 + $0x740] sm:$0xff]
    %v251 = vld [vmem:[%s0 + $0x748] sm:$0xff]
    %v252 = vld [vmem:[%s0 + $0x750] sm:$0xff]
    %v253 = vld [vmem:[%s0 + $0x758] sm:$0xff]
    %v254 = vld [vmem:[%s0 + $0x760] sm:$0xff]
    %v255 = vld [vmem:[%s0 + $0x768] sm:$0xff]
    %v256 = vld [vmem:[%s0 + $0x770] sm:$0xff]
    %v257 = vld [vmem:[%s0 + $0x778] sm:$0xff]
    %v258 = vld [vmem:[%s0 + $0x780] sm:$0xff]
    %v259 = vld [vmem:[%s0 + $0x788] sm:$0xff]
    %v260 = vld [vmem:[%s0 + $0x790] sm:$0xff]
    %v261 = vld [vmem:[%s0 + $0x798] sm:$0xff]
    %v262 = vld [vmem:[%s0 + $0x7a0] sm:$0xff]
    %v263 = vld [vmem:[%s0 + $0x7a8] sm:$0xff]
    %v264 = vld [vmem:[%s0 + $0x7b0] sm:$0xff]
    %v265 = vld [vmem:[%s0 + $0x7b8] sm:$0xff]
    %v266 = vld [vmem:[%s0 + $0x7c0] sm:$0xff]
    %v267 = vld [vmem:[%s0 + $0x7c8] sm:$0xff]
    %v268 = vld [vmem:[%s0 + $0x7d0] sm:$0xff]
    %v269 = vld [vmem:[%s0 + $0x7d8] sm:$0xff]
    %v270 = vld [vmem:[%s0 + $0x7e0] sm:$0xff]
    %v271 = vld [vmem:[%s0 + $0x7e8] sm:$0xff]
    %v272 = vld [vmem:[%s0 + $0x7f0] sm:$0xff]
    %v273 = vld [vmem:[%s0 + $0x7f8] sm:$0xff]
    %v274 = vld [vmem:[%s0 + $0x800] sm:$0xff]
    %v275 = vld [vmem:[%s0 + $0x808] sm:$0xff]
    %v276 = vld [vmem:[%s0 + $0x810] sm:$0xff]
    %v277 = vld [vmem:[%s0 + $0x818] sm:$0xff]
    %v278 = vld [vmem:[%s0 + $0x820] sm:$0xff]
    %v279 = vld [vmem:[%s0 + $0x828] sm:$0xff]
    %v280 = vld [vmem:[%s0 + $0x830] sm:$0xff]
    %v281 = vld [vmem:[%s0 + $0x838] sm:$0xff]
    %v282 = vld [vmem:[%s0 + $0x840] sm:$0xff]
    %v283 = vld [vmem:[%s0 + $0x848] sm:$0xff]
    %v284 = vld [vmem:[%s0 + $0x850] sm:$0xff]
    %v285 = vld [vmem:[%s0 + $0x858] sm:$0xff]
    %v286 = vld [vmem:[%s0 + $0x860] sm:$0xff]
    %v287 = vld [vmem:[%s0 + $0x868] sm:$0xff]
    %v288 = vld [vmem:[%s0 + $0x870] sm:$0xff]
    %v289 = vld [vmem:[%s0 + $0x878] sm:$0xff]
    %v290 = vld [vmem:[%s0 + $0x880] sm:$0xff]
    %v291 = vld [vmem:[%s0 + $0x888] sm:$0xff]
    %v292 = vld [vmem:[%s0 + $0x890] sm:$0xff]
    %v293 = vld [vmem:[%s0 + $0x898] sm:$0xff]
    %v294 = vld [vmem:[%s0 + $0x8a0] sm:$0xff]
    %v295 = vld [vmem:[%s0 + $0x8a8] sm:$0xff]
    %v296 = vld [vmem:[%s0 + $0x8b0] sm:$0xff]
    %v297 = vld [vmem:[%s0 + $0x8b8] sm:$0xff]
    %v298 = vld [vmem:[%s0 + $0x8c0] sm:$0xff]
    %v299 = vld [vmem:[%s0 + $0x8c8] sm:$0xff]
    %v300 = vld [vmem:[%s0 + $0x8d0] sm:$0xff]
    %v301 = vld [vmem:[%s0 + $0x8d8] sm:$0xff]
    %v302 = vld [vmem:[%s0 + $0x8e0] sm:$0xff]
    %v303 = vld [vmem:[%s0 + $0x8e8] sm:$0xff]
    %v304 = vld [vmem:[%s0 + $0x8f0] sm:$0xff]
    %v305 = vld [vmem:[%s0 + $0x8f8] sm:$0xff]
    %v306 = vld [vmem:[%s0 + $0x900] sm:$0xff]
    %v307 = vld [vmem:[%s0 + $0x908] sm:$0xff]
    %v308 = vld [vmem:[%s0 + $0x910] sm:$0xff]
    %v309 = vld [vmem:[%s0 + $0x918] sm:$0xff]
    %v310 = vld [vmem:[%s0 + $0x920] sm:$0xff]
    %v311 = vld [vmem:[%s0 + $0x928] sm:$0xff]
    %v312 = vld [vmem:[%s0 + $0x930] sm:$0xff]
    %v313 = vld [vmem:[%s0 + $0x938] sm:$0xff]
    %v314 = vld [vmem:[%s0 + $0x940] sm:$0xff]
    %v315 = vld [vmem:[%s0 + $0x948] sm:$0xff]
    %v316 = vld [vmem:[%s0 + $0x950] sm:$0xff]
    %v317 = vld [vmem:[%s0 + $0x958] sm:$0xff]
    %v318 = vld [vmem:[%s1] sm:$0xff]
    %v319 = vld [vmem:[%s1 + $0x8] sm:$0xff]
    %v320 = vld [vmem:[%s1 + $0x10] sm:$0xff]
    %v321 = vld [vmem:[%s1 + $0x18] sm:$0xff]
    %v322 = vld [vmem:[%s1 + $0x20] sm:$0xff]
    %v323 = vld [vmem:[%s1 + $0x28] sm:$0xff]
    %v324 = vld [vmem:[%s1 + $0x30] sm:$0xff]
    %v325 = vld [vmem:[%s1 + $0x38] sm:$0xff]
    %v326 = vld [vmem:[%s1 + $0x40] sm:$0xff]
    %v327 = vld [vmem:[%s1 + $0x48] sm:$0xff]
    %v328 = vld [vmem:[%s1 + $0x50] sm:$0xff]
    %v329 = vld [vmem:[%s1 + $0x58] sm:$0xff]
    %v330 = vld [vmem:[%s1 + $0x60] sm:$0xff]
    %v331 = vld [vmem:[%s1 + $0x68] sm:$0xff]
    %v332 = vld [vmem:[%s1 + $0x70] sm:$0xff]
    %v333 = vld [vmem:[%s1 + $0x78] sm:$0xff]
    %v334 = vld [vmem:[%s1 + $0x80] sm:$0xff]
    %v335 = vld [vmem:[%s1 + $0x88] sm:$0xff]
    %v336 = vld [vmem:[%s1 + $0x90] sm:$0xff]
    %v337 = vld [vmem:[%s1 + $0x98] sm:$0xff]
    %v338 = vld [vmem:[%s1 + $0xa0] sm:$0xff]
    %v339 = vld [vmem:[%s1 + $0xa8] sm:$0xff]
    %v340 = vld [vmem:[%s1 + $0xb0] sm:$0xff]
    %v341 = vld [vmem:[%s1 + $0xb8] sm:$0xff]
    %v342 = vld [vmem:[%s1 + $0xc0] sm:$0xff]
    %v343 = vld [vmem:[%s1 + $0xc8] sm:$0xff]
    %v344 = vld [vmem:[%s1 + $0xd0] sm:$0xff]
    %v345 = vld [vmem:[%s1 + $0xd8] sm:$0xff]
    %v346 = vld [vmem:[%s1 + $0xe0] sm:$0xff]
    %v347 = vld [vmem:[%s1 + $0xe8] sm:$0xff]
    %v348 = vld [vmem:[%s1 + $0xf0] sm:$0xff]
    %v349 = vld [vmem:[%s1 + $0xf8] sm:$0xff]
    %v350 = vld [vmem:[%s1 + $0x100] sm:$0xff]
    %v351 = vld [vmem:[%s1 + $0x108] sm:$0xff]
    %v352 = vld [vmem:[%s1 + $0x110] sm:$0xff]
    %v353 = vld [vmem:[%s1 + $0x118] sm:$0xff]
    %v354 = vld [vmem:[%s1 + $0x120] sm:$0xff]
    %v355 = vld [vmem:[%s1 + $0x128] sm:$0xff]
    %v356 = vld [vmem:[%s1 + $0x130] sm:$0xff]
    %v357 = vld [vmem:[%s1 + $0x138] sm:$0xff]
    %v358 = vld [vmem:[%s1 + $0x140] sm:$0xff]
    %v359 = vld [vmem:[%s1 + $0x148] sm:$0xff]
    %v360 = vld [vmem:[%s1 + $0x150] sm:$0xff]
    %v361 = vld [vmem:[%s1 + $0x158] sm:$0xff]
    %v362 = vld [vmem:[%s1 + $0x160] sm:$0xff]
    %v363 = vld [vmem:[%s1 + $0x168] sm:$0xff]
    %v364 = vld [vmem:[%s1 + $0x170] sm:$0xff]
    %v365 = vld [vmem:[%s1 + $0x178] sm:$0xff]
    %v366 = vld [vmem:[%s1 + $0x180] sm:$0xff]
    %v367 = vld [vmem:[%s1 + $0x188] sm:$0xff]
    %v368 = vld [vmem:[%s1 + $0x190] sm:$0xff]
    %v369 = vld [vmem:[%s1 + $0x198] sm:$0xff]
    %v370 = vld [vmem:[%s1 + $0x1a0] sm:$0xff]
    %v371 = vld [vmem:[%s1 + $0x1a8] sm:$0xff]
    %v372 = vld [vmem:[%s1 + $0x1b0] sm:$0xff]
    %v373 = vld [vmem:[%s1 + $0x1b8] sm:$0xff]
    %v374 = vld [vmem:[%s1 + $0x1c0] sm:$0xff]
    %v375 = vld [vmem:[%s1 + $0x1c8] sm:$0xff]
    %v376 = vld [vmem:[%s1 + $0x1d0] sm:$0xff]
    %v377 = vld [vmem:[%s1 + $0x1d8] sm:$0xff]
    %v378 = vld [vmem:[%s1 + $0x1e0] sm:$0xff]
    %v379 = vld [vmem:[%s1 + $0x1e8] sm:$0xff]
    %v380 = vld [vmem:[%s1 + $0x1f0] sm:$0xff]
    %v381 = vld [vmem:[%s1 + $0x1f8] sm:$0xff]
    %v382 = vld [vmem:[%s1 + $0x200] sm:$0xff]
    %v383 = vld [vmem:[%s1 + $0x208] sm:$0xff]
    %v384 = vld [vmem:[%s1 + $0x210] sm:$0xff]
    %v385 = vld [vmem:[%s1 + $0x218] sm:$0xff]
    %v386 = vld [vmem:[%s1 + $0x220] sm:$0xff]
    %v387 = vld [vmem:[%s1 + $0x228] sm:$0xff]
    %v388 = vld [vmem:[%s1 + $0x230] sm:$0xff]
    %v389 = vld [vmem:[%s1 + $0x238] sm:$0xff]
    %v390 = vld [vmem:[%s1 + $0x240] sm:$0xff]
    %v391 = vld [vmem:[%s1 + $0x248] sm:$0xff]
    %v392 = vld [vmem:[%s1 + $0x250] sm:$0xff]
    %v393 = vld [vmem:[%s1 + $0x258] sm:$0xff]
    %v394 = vld [vmem:[%s1 + $0x260] sm:$0xff]
    %v395 = vld [vmem:[%s1 + $0x268] sm:$0xff]
    %v396 = vld [vmem:[%s1 + $0x270] sm:$0xff]
    %v397 = vld [vmem:[%s1 + $0x278] sm:$0xff]
    %v398 = vld [vmem:[%s1 + $0x280] sm:$0xff]
    %v399 = vld [vmem:[%s1 + $0x288] sm:$0xff]
    %v400 = vld [vmem:[%s1 + $0x290] sm:$0xff]
    %v401 = vld [vmem:[%s1 + $0x298] sm:$0xff]
    %v402 = vld [vmem:[%s1 + $0x2a0] sm:$0xff]
    %v403 = vld [vmem:[%s1 + $0x2a8] sm:$0xff]
    %v404 = vld [vmem:[%s1 + $0x2b0] sm:$0xff]
    %v405 = vld [vmem:[%s1 + $0x2b8] sm:$0xff]
    %v406 = vld [vmem:[%s1 + $0x2c0] sm:$0xff]
    %v407 = vld [vmem:[%s1 + $0x2c8] sm:$0xff]
    %v408 = vld [vmem:[%s1 + $0x2d0] sm:$0xff]
    %v409 = vld [vmem:[%s1 + $0x2d8] sm:$0xff]
    %v410 = vld [vmem:[%s1 + $0x2e0] sm:$0xff]
    %v411 = vld [vmem:[%s1 + $0x2e8] sm:$0xff]
    %v412 = vld [vmem:[%s1 + $0x2f0] sm:$0xff]
    %v413 = vld [vmem:[%s1 + $0x2f8] sm:$0xff]
    %v414 = vld [vmem:[%s1 + $0x300] sm:$0xff]
    %v415 = vld [vmem:[%s1 + $0x308] sm:$0xff]
    %v416 = vld [vmem:[%s1 + $0x310] sm:$0xff]
    %v417 = vld [vmem:[%s1 + $0x318] sm:$0xff]
    %v418 = vld [vmem:[%s1 + $0x320] sm:$0xff]
    %v419 = vld [vmem:[%s1 + $0x328] sm:$0xff]
    %v420 = vld [vmem:[%s1 + $0x330] sm:$0xff]
    %v421 = vld [vmem:[%s1 + $0x338] sm:$0xff]
    %v422 = vld [vmem:[%s1 + $0x340] sm:$0xff]
    %v423 = vld [vmem:[%s1 + $0x348] sm:$0xff]
    %v424 = vld [vmem:[%s1 + $0x350] sm:$0xff]
    %v425 = vld [vmem:[%s1 + $0x358] sm:$0xff]
    %v426 = vld [vmem:[%s1 + $0x360] sm:$0xff]
    %v427 = vld [vmem:[%s1 + $0x368] sm:$0xff]
    %v428 = vld [vmem:[%s1 + $0x370] sm:$0xff]
    %v429 = vld [vmem:[%s1 + $0x378] sm:$0xff]
    %v430 = vld [vmem:[%s1 + $0x380] sm:$0xff]
    %v431 = vld [vmem:[%s1 + $0x388] sm:$0xff]
    %v432 = vld [vmem:[%s1 + $0x390] sm:$0xff]
    %v433 = vld [vmem:[%s1 + $0x398] sm:$0xff]
    %v434 = vld [vmem:[%s1 + $0x3a0] sm:$0xff]
    %v435 = vld [vmem:[%s1 + $0x3a8] sm:$0xff]
    %v436 = vld [vmem:[%s1 + $0x3b0] sm:$0xff]
    %v437 = vld [vmem:[%s1 + $0x3b8] sm:$0xff]
    %v438 = vld [vmem:[%s1 + $0x3c0] sm:$0xff]
    %v439 = vld [vmem:[%s1 + $0x3c8] sm:$0xff]
    %v440 = vld [vmem:[%s1 + $0x3d0] sm:$0xff]
    %v441 = vld [vmem:[%s1 + $0x3d8] sm:$0xff]
    %v442 = vld [vmem:[%s1 + $0x3e0] sm:$0xff]
    %v443 = vld [vmem:[%s1 + $0x3e8] sm:$0xff]
    %v444 = vld [vmem:[%s1 + $0x3f0] sm:$0xff]
    %v445 = vld [vmem:[%s1 + $0x3f8] sm:$0xff]
    %v446 = vld [vmem:[%s1 + $0x400] sm:$0xff]
    %v447 = vld [vmem:[%s1 + $0x408] sm:$0xff]
    %v448 = vld [vmem:[%s1 + $0x410] sm:$0xff]
    %v449 = vld [vmem:[%s1 + $0x418] sm:$0xff]
    %v450 = vld [vmem:[%s1 + $0x420] sm:$0xff]
    %v451 = vld [vmem:[%s1 + $0x428] sm:$0xff]
    %v452 = vld [vmem:[%s1 + $0x430] sm:$0xff]
    %v453 = vld [vmem:[%s1 + $0x438] sm:$0xff]
    %v454 = vld [vmem:[%s1 + $0x440] sm:$0xff]
    %v455 = vld [vmem:[%s1 + $0x448] sm:$0xff]
    %v456 = vld [vmem:[%s1 + $0x450] sm:$0xff]
    %v457 = vld [vmem:[%s1 + $0x458] sm:$0xff]
    %v458 = vld [vmem:[%s1 + $0x460] sm:$0xff]
    %v459 = vld [vmem:[%s1 + $0x468] sm:$0xff]
    %v460 = vld [vmem:[%s1 + $0x470] sm:$0xff]
    %v461 = vld [vmem:[%s1 + $0x478] sm:$0xff]
    %v462 = vld [vmem:[%s1 + $0x480] sm:$0xff]
    %v463 = vld [vmem:[%s1 + $0x488] sm:$0xff]
    %v464 = vld [vmem:[%s1 + $0x490] sm:$0xff]
    %v465 = vld [vmem:[%s1 + $0x498] sm:$0xff]
    %v466 = vld [vmem:[%s1 + $0x4a0] sm:$0xff]
    %v467 = vld [vmem:[%s1 + $0x4a8] sm:$0xff]
    %v468 = vld [vmem:[%s1 + $0x4b0] sm:$0xff]
    %v469 = vld [vmem:[%s1 + $0x4b8] sm:$0xff]
    %v470 = vld [vmem:[%s1 + $0x4c0] sm:$0xff]
    %v471 = vld [vmem:[%s1 + $0x4c8] sm:$0xff]
    %v472 = vld [vmem:[%s1 + $0x4d0] sm:$0xff]
    %v473 = vld [vmem:[%s1 + $0x4d8] sm:$0xff]
    %v474 = vld [vmem:[%s1 + $0x4e0] sm:$0xff]
    %v475 = vld [vmem:[%s1 + $0x4e8] sm:$0xff]
    %v476 = vld [vmem:[%s1 + $0x4f0] sm:$0xff]
    %v477 = vld [vmem:[%s1 + $0x4f8] sm:$0xff]
    %v478 = vld [vmem:[%s1 + $0x500] sm:$0xff]
    %v479 = vld [vmem:[%s1 + $0x508] sm:$0xff]
    %v480 = vld [vmem:[%s1 + $0x510] sm:$0xff]
    %v481 = vld [vmem:[%s1 + $0x518] sm:$0xff]
    %v482 = vld [vmem:[%s1 + $0x520] sm:$0xff]
    %v483 = vld [vmem:[%s1 + $0x528] sm:$0xff]
    %v484 = vld [vmem:[%s1 + $0x530] sm:$0xff]
    %v485 = vld [vmem:[%s1 + $0x538] sm:$0xff]
    %v486 = vld [vmem:[%s1 + $0x540] sm:$0xff]
    %v487 = vld [vmem:[%s1 + $0x548] sm:$0xff]
    %v488 = vld [vmem:[%s1 + $0x550] sm:$0xff]
    %v489 = vld [vmem:[%s1 + $0x558] sm:$0xff]
    %v490 = vld [vmem:[%s1 + $0x560] sm:$0xff]
    %v491 = vld [vmem:[%s1 + $0x568] sm:$0xff]
    %v492 = vld [vmem:[%s1 + $0x570] sm:$0xff]
    %v493 = vld [vmem:[%s1 + $0x578] sm:$0xff]
    %v494 = vld [vmem:[%s1 + $0x580] sm:$0xff]
    %v495 = vld [vmem:[%s1 + $0x588] sm:$0xff]
    %v496 = vld [vmem:[%s1 + $0x590] sm:$0xff]
    %v497 = vld [vmem:[%s1 + $0x598] sm:$0xff]
    %v498 = vld [vmem:[%s1 + $0x5a0] sm:$0xff]
    %v499 = vld [vmem:[%s1 + $0x5a8] sm:$0xff]
    %v500 = vld [vmem:[%s1 + $0x5b0] sm:$0xff]
    %v501 = vld [vmem:[%s1 + $0x5b8] sm:$0xff]
    %v502 = vld [vmem:[%s1 + $0x5c0] sm:$0xff]
    %v503 = vld [vmem:[%s1 + $0x5c8] sm:$0xff]
    %v504 = vld [vmem:[%s1 + $0x5d0] sm:$0xff]
    %v505 = vld [vmem:[%s1 + $0x5d8] sm:$0xff]
    %v506 = vld [vmem:[%s1 + $0x5e0] sm:$0xff]
    %v507 = vld [vmem:[%s1 + $0x5e8] sm:$0xff]
    %v508 = vld [vmem:[%s1 + $0x5f0] sm:$0xff]
    %v509 = vld [vmem:[%s1 + $0x5f8] sm:$0xff]
    %v510 = vld [vmem:[%s1 + $0x600] sm:$0xff]
    %v511 = vld [vmem:[%s1 + $0x608] sm:$0xff]
    %v512 = vld [vmem:[%s1 + $0x610] sm:$0xff]
    %v513 = vld [vmem:[%s1 + $0x618] sm:$0xff]
    %v514 = vld [vmem:[%s1 + $0x620] sm:$0xff]
    %v515 = vld [vmem:[%s1 + $0x628] sm:$0xff]
    %v516 = vld [vmem:[%s1 + $0x630] sm:$0xff]
    %v517 = vld [vmem:[%s1 + $0x638] sm:$0xff]
    %v518 = vld [vmem:[%s1 + $0x640] sm:$0xff]
    %v519 = vld [vmem:[%s1 + $0x648] sm:$0xff]
    %v520 = vld [vmem:[%s1 + $0x650] sm:$0xff]
    %v521 = vld [vmem:[%s1 + $0x658] sm:$0xff]
    %v522 = vld [vmem:[%s1 + $0x660] sm:$0xff]
    %v523 = vld [vmem:[%s1 + $0x668] sm:$0xff]
    %v524 = vld [vmem:[%s1 + $0x670] sm:$0xff]
    %v525 = vld [vmem:[%s1 + $0x678] sm:$0xff]
    %v526 = vld [vmem:[%s1 + $0x680] sm:$0xff]
    %v527 = vld [vmem:[%s1 + $0x688] sm:$0xff]
    %v528 = vld [vmem:[%s1 + $0x690] sm:$0xff]
    %v529 = vld [vmem:[%s1 + $0x698] sm:$0xff]
    %v530 = vld [vmem:[%s1 + $0x6a0] sm:$0xff]
    %v531 = vld [vmem:[%s1 + $0x6a8] sm:$0xff]
    %v532 = vld [vmem:[%s1 + $0x6b0] sm:$0xff]
    %v533 = vld [vmem:[%s1 + $0x6b8] sm:$0xff]
    %v534 = vld [vmem:[%s1 + $0x6c0] sm:$0xff]
    %v535 = vld [vmem:[%s1 + $0x6c8] sm:$0xff]
    %v536 = vld [vmem:[%s1 + $0x6d0] sm:$0xff]
    %v537 = vld [vmem:[%s1 + $0x6d8] sm:$0xff]
    %v538 = vld [vmem:[%s1 + $0x6e0] sm:$0xff]
    %v539 = vld [vmem:[%s1 + $0x6e8] sm:$0xff]
    %v540 = vld [vmem:[%s1 + $0x6f0] sm:$0xff]
    %v541 = vld [vmem:[%s1 + $0x6f8] sm:$0xff]
    %v542 = vld [vmem:[%s1 + $0x700] sm:$0xff]
    %v543 = vld [vmem:[%s1 + $0x708] sm:$0xff]
    %v544 = vld [vmem:[%s1 + $0x710] sm:$0xff]
    %v545 = vld [vmem:[%s1 + $0x718] sm:$0xff]
    %v546 = vld [vmem:[%s1 + $0x720] sm:$0xff]
    %v547 = vld [vmem:[%s1 + $0x728] sm:$0xff]
    %v548 = vld [vmem:[%s1 + $0x730] sm:$0xff]
    %v549 = vld [vmem:[%s1 + $0x738] sm:$0xff]
    %v550 = vld [vmem:[%s1 + $0x740] sm:$0xff]
    %v551 = vld [vmem:[%s1 + $0x748] sm:$0xff]
    %v552 = vld [vmem:[%s1 + $0x750] sm:$0xff]
    %v553 = vld [vmem:[%s1 + $0x758] sm:$0xff]
    %v554 = vld [vmem:[%s1 + $0x760] sm:$0xff]
    %v555 = vld [vmem:[%s1 + $0x768] sm:$0xff]
    %v556 = vld [vmem:[%s1 + $0x770] sm:$0xff]
    %v557 = vld [vmem:[%s1 + $0x778] sm:$0xff]
    %v558 = vld [vmem:[%s1 + $0x780] sm:$0xff]
    %v559 = vld [vmem:[%s1 + $0x788] sm:$0xff]
    %v560 = vld [vmem:[%s1 + $0x790] sm:$0xff]
    %v561 = vld [vmem:[%s1 + $0x798] sm:$0xff]
    %v562 = vld [vmem:[%s1 + $0x7a0] sm:$0xff]
    %v563 = vld [vmem:[%s1 + $0x7a8] sm:$0xff]
    %v564 = vld [vmem:[%s1 + $0x7b0] sm:$0xff]
    %v565 = vld [vmem:[%s1 + $0x7b8] sm:$0xff]
    %v566 = vld [vmem:[%s1 + $0x7c0] sm:$0xff]
    %v567 = vld [vmem:[%s1 + $0x7c8] sm:$0xff]
    %vm568 = vcmask 392192
    %v570 = vsel %vm568, %v327, 0
    %v573 = vsel %vm568, %v337, 0
    %v576 = vsel %vm568, %v347, 0
    %v579 = vsel %vm568, %v357, 0
    %v582 = vsel %vm568, %v367, 0
    %v585 = vsel %vm568, %v377, 0
    %v588 = vsel %vm568, %v387, 0
    %v591 = vsel %vm568, %v397, 0
    %v594 = vsel %vm568, %v407, 0
    %v597 = vsel %vm568, %v417, 0
    %v600 = vsel %vm568, %v427, 0
    %v603 = vsel %vm568, %v437, 0
    %v606 = vsel %vm568, %v447, 0
    %v609 = vsel %vm568, %v457, 0
    %v612 = vsel %vm568, %v467, 0
    %v615 = vsel %vm568, %v477, 0
    %v618 = vsel %vm568, %v487, 0
    %v621 = vsel %vm568, %v497, 0
    %v624 = vsel %vm568, %v507, 0
    %v627 = vsel %vm568, %v517, 0
    %v630 = vsel %vm568, %v527, 0
    %v633 = vsel %vm568, %v537, 0
    %v636 = vsel %vm568, %v547, 0
    %v639 = vsel %vm568, %v557, 0
    %v642 = vsel %vm568, %v567, 0
    %644 = vmatprep.subr.mxu0 %v19
    %645 = vmatpush1.msra.mxu0 %v18
    %646 = vmatprep.subr.mxu0 %v21
    %647 = vmatpush1.msra.mxu0 %v20
    %648 = vmatprep.subr.mxu0 %v23
    %649 = vmatpush1.msra.mxu0 %v22
    %650 = vmatprep.subr.mxu0 %v25
    %651 = vmatpush1.msra.mxu0 %v24
    %652 = vmatprep.subr.mxu0 %v27
    %653 = vmatpush1.msra.mxu0 %v26
    %654 = vmatprep.subr.mxu0 %v29
    %655 = vmatpush1.msra.mxu0 %v28
    %656 = vmatprep.subr.mxu0 %v31
    %657 = vmatpush1.msra.mxu0 %v30
    %658 = vmatprep.subr.mxu0 %v33
    %659 = vmatpush1.msra.mxu0 %v32
    %660 = vmatprep.subr.mxu0 %v35
    %661 = vmatpush1.msra.mxu0 %v34
    %662 = vmatprep.subr.mxu0 %v37
    %663 = vmatpush1.msra.mxu0 %v36
    %664 = vmatprep.subr.mxu0 %v39
    %665 = vmatpush1.msra.mxu0 %v38
    %666 = vmatprep.subr.mxu0 %v41
    %667 = vmatpush1.msra.mxu0 %v40
    %668 = vmatprep.subr.mxu0 %v43
    %669 = vmatpush1.msra.mxu0 %v42
    %670 = vmatprep.subr.mxu0 %v45
    %671 = vmatpush1.msra.mxu0 %v44
    %672 = vmatprep.subr.mxu0 %v47
    %673 = vmatpush1.msra.mxu0 %v46
    %674 = vmatprep.subr.mxu0 %v49
    %675 = vmatpush1.msra.mxu0 %v48
    %676 = vmatprep.subr.mxu0 %v51
    %677 = vmatpush1.msra.mxu0 %v50
    %678 = vmatprep.subr.mxu0 %v53
    %679 = vmatpush1.msra.mxu0 %v52
    %680 = vmatprep.subr.mxu0 %v55
    %681 = vmatpush1.msra.mxu0 %v54
    %682 = vmatprep.subr.mxu0 %v57
    %683 = vmatpush1.msra.mxu0 %v56
    %684 = vmatprep.subr.mxu0 %v59
    %685 = vmatpush1.msra.mxu0 %v58
    %686 = vmatprep.subr.mxu0 %v61
    %687 = vmatpush1.msra.mxu0 %v60
    %688 = vmatprep.subr.mxu0 %v63
    %689 = vmatpush1.msra.mxu0 %v62
    %690 = vmatprep.subr.mxu0 %v65
    %691 = vmatpush1.msra.mxu0 %v64
    %692 = vmatprep.subr.mxu0 %v67
    %693 = vmatpush1.msra.mxu0 %v66
    %694 = vmatprep.subr.mxu0 %v69
    %695 = vmatpush1.msra.mxu0 %v68
    %696 = vmatprep.subr.mxu0 %v71
    %697 = vmatpush1.msra.mxu0 %v70
    %698 = vmatprep.subr.mxu0 %v73
    %699 = vmatpush1.msra.mxu0 %v72
    %700 = vmatprep.subr.mxu0 %v75
    %701 = vmatpush1.msra.mxu0 %v74
    %702 = vmatprep.subr.mxu0 %v77
    %703 = vmatpush1.msra.mxu0 %v76
    %704 = vmatprep.subr.mxu0 %v79
    %705 = vmatpush1.msra.mxu0 %v78
    %706 = vmatprep.subr.mxu0 %v81
    %707 = vmatpush1.msra.mxu0 %v80
    %708 = vmatprep.mubr.f32.mxu0 %v319
    %709 = vmatmul.mubr.f32.gmra.mrb[0].mxu0 %v318
    %v710 = vpop.f32.mrb[0].mxu0
    %v711 = vadd.f32 0.0, %v710
    %v712 = vpop.f32.mrb[0].mxu0
    %v713 = vadd.f32 0.0, %v712
    %714 = vmatprep.mubr.f32.mxu0 %v329
    %715 = vmatmul.mubr.f32.gmra.mrb[0].mxu0 %v328
    %v716 = vpop.f32.mrb[0].mxu0
    %v717 = vadd.f32 0.0, %v716
    %v718 = vpop.f32.mrb[0].mxu0
    %v719 = vadd.f32 0.0, %v718
    %720 = vmatprep.mubr.f32.mxu0 %v339
    %721 = vmatmul.mubr.f32.gmra.mrb[0].mxu0 %v338
    %v722 = vpop.f32.mrb[0].mxu0
    %v723 = vadd.f32 0.0, %v722
    %v724 = vpop.f32.mrb[0].mxu0
    %v725 = vadd.f32 0.0, %v724
    %726 = vmatprep.mubr.f32.mxu0 %v349
    %727 = vmatmul.mubr.f32.gmra.mrb[0].mxu0 %v348
    %v728 = vpop.f32.mrb[0].mxu0
    %v729 = vadd.f32 0.0, %v728
    %v730 = vpop.f32.mrb[0].mxu0
    %v731 = vadd.f32 0.0, %v730
    %732 = vmatprep.mubr.f32.mxu0 %v359
    %733 = vmatmul.mubr.f32.gmra.mrb[0].mxu0 %v358
    %v734 = vpop.f32.mrb[0].mxu0
    %v735 = vadd.f32 0.0, %v734
    %v736 = vpop.f32.mrb[0].mxu0
    %v737 = vadd.f32 0.0, %v736
    %738 = vmatprep.mubr.f32.mxu0 %v369
    %739 = vmatmul.mubr.f32.gmra.mrb[0].mxu0 %v368
    %v740 = vpop.f32.mrb[0].mxu0
    %v741 = vadd.f32 0.0, %v740
    %v742 = vpop.f32.mrb[0].mxu0
    %v743 = vadd.f32 0.0, %v742
    %744 = vmatprep.mubr.f32.mxu0 %v379
    %745 = vmatmul.mubr.f32.gmra.mrb[0].mxu0 %v378
    %v746 = vpop.f32.mrb[0].mxu0
    %v747 = vadd.f32 0.0, %v746
    %v748 = vpop.f32.mrb[0].mxu0
    %v749 = vadd.f32 0.0, %v748
    %750 = vmatprep.mubr.f32.mxu0 %v389
    %751 = vmatmul.mubr.f32.gmra.mrb[0].mxu0 %v388
    %v752 = vpop.f32.mrb[0].mxu0
    %v753 = vadd.f32 0.0, %v752
    %v754 = vpop.f32.mrb[0].mxu0
    %v755 = vadd.f32 0.0, %v754
    %756 = vmatprep.mubr.f32.mxu0 %v399
    %757 = vmatmul.mubr.f32.gmra.mrb[0].mxu0 %v398
    %v758 = vpop.f32.mrb[0].mxu0
    %v759 = vadd.f32 0.0, %v758
    %v760 = vpop.f32.mrb[0].mxu0
    %v761 = vadd.f32 0.0, %v760
    %762 = vmatprep.mubr.f32.mxu0 %v409
    %763 = vmatmul.mubr.f32.gmra.mrb[0].mxu0 %v408
    %v764 = vpop.f32.mrb[0].mxu0
    %v765 = vadd.f32 0.0, %v764
    %v766 = vpop.f32.mrb[0].mxu0
    %v767 = vadd.f32 0.0, %v766
    %768 = vmatprep.mubr.f32.mxu0 %v419
    %769 = vmatmul.mubr.f32.gmra.mrb[0].mxu0 %v418
    %v770 = vpop.f32.mrb[0].mxu0
    %v771 = vadd.f32 0.0, %v770
    %v772 = vpop.f32.mrb[0].mxu0
    %v773 = vadd.f32 0.0, %v772
    %774 = vmatprep.mubr.f32.mxu0 %v429
    %775 = vmatmul.mubr.f32.gmra.mrb[0].mxu0 %v428
    %v776 = vpop.f32.mrb[0].mxu0
    %v777 = vadd.f32 0.0, %v776
    %v778 = vpop.f32.mrb[0].mxu0
    %v779 = vadd.f32 0.0, %v778
    %780 = vmatprep.mubr.f32.mxu0 %v439
    %781 = vmatmul.mubr.f32.gmra.mrb[0].mxu0 %v438
    %v782 = vpop.f32.mrb[0].mxu0
    %v783 = vadd.f32 0.0, %v782
    %v784 = vpop.f32.mrb[0].mxu0
    %v785 = vadd.f32 0.0, %v784
    %786 = vmatprep.mubr.f32.mxu0 %v449
    %787 = vmatmul.mubr.f32.gmra.mrb[0].mxu0 %v448
    %v788 = vpop.f32.mrb[0].mxu0
    %v789 = vadd.f32 0.0, %v788
    %v790 = vpop.f32.mrb[0].mxu0
    %v791 = vadd.f32 0.0, %v790
    %792 = vmatprep.mubr.f32.mxu0 %v459
    %793 = vmatmul.mubr.f32.gmra.mrb[0].mxu0 %v458
    %v794 = vpop.f32.mrb[0].mxu0
    %v795 = vadd.f32 0.0, %v794
    %v796 = vpop.f32.mrb[0].mxu0
    %v797 = vadd.f32 0.0, %v796
    %798 = vmatprep.mubr.f32.mxu0 %v469
    %799 = vmatmul.mubr.f32.gmra.mrb[0].mxu0 %v468
    %v800 = vpop.f32.mrb[0].mxu0
    %v801 = vadd.f32 0.0, %v800
    %v802 = vpop.f32.mrb[0].mxu0
    %v803 = vadd.f32 0.0, %v802
    %804 = vmatprep.mubr.f32.mxu0 %v479
    %805 = vmatmul.mubr.f32.gmra.mrb[0].mxu0 %v478
    %v806 = vpop.f32.mrb[0].mxu0
    %v807 = vadd.f32 0.0, %v806
    %v808 = vpop.f32.mrb[0].mxu0
    %v809 = vadd.f32 0.0, %v808
    %810 = vmatprep.mubr.f32.mxu0 %v489
    %811 = vmatmul.mubr.f32.gmra.mrb[0].mxu0 %v488
    %v812 = vpop.f32.mrb[0].mxu0
    %v813 = vadd.f32 0.0, %v812
    %v814 = vpop.f32.mrb[0].mxu0
    %v815 = vadd.f32 0.0, %v814
    %816 = vmatprep.mubr.f32.mxu0 %v499
    %817 = vmatmul.mubr.f32.gmra.mrb[0].mxu0 %v498
    %v818 = vpop.f32.mrb[0].mxu0
    %v819 = vadd.f32 0.0, %v818
    %v820 = vpop.f32.mrb[0].mxu0
    %v821 = vadd.f32 0.0, %v820
    %822 = vmatprep.mubr.f32.mxu0 %v509
    %823 = vmatmul.mubr.f32.gmra.mrb[0].mxu0 %v508
    %v824 = vpop.f32.mrb[0].mxu0
    %v825 = vadd.f32 0.0, %v824
    %v826 = vpop.f32.mrb[0].mxu0
    %v827 = vadd.f32 0.0, %v826
    %828 = vmatprep.mubr.f32.mxu0 %v519
    %829 = vmatmul.mubr.f32.gmra.mrb[0].mxu0 %v518
    %v830 = vpop.f32.mrb[0].mxu0
    %v831 = vadd.f32 0.0, %v830
    %v832 = vpop.f32.mrb[0].mxu0
    %v833 = vadd.f32 0.0, %v832
    %834 = vmatprep.mubr.f32.mxu0 %v529
    %835 = vmatmul.mubr.f32.gmra.mrb[0].mxu0 %v528
    %v836 = vpop.f32.mrb[0].mxu0
    %v837 = vadd.f32 0.0, %v836
    %v838 = vpop.f32.mrb[0].mxu0
    %v839 = vadd.f32 0.0, %v838
    %840 = vmatprep.mubr.f32.mxu0 %v539
    %841 = vmatmul.mubr.f32.gmra.mrb[0].mxu0 %v538
    %v842 = vpop.f32.mrb[0].mxu0
    %v843 = vadd.f32 0.0, %v842
    %v844 = vpop.f32.mrb[0].mxu0
    %v845 = vadd.f32 0.0, %v844
    %846 = vmatprep.mubr.f32.mxu0 %v549
    %847 = vmatmul.mubr.f32.gmra.mrb[0].mxu0 %v548
    %v848 = vpop.f32.mrb[0].mxu0
    %v849 = vadd.f32 0.0, %v848
    %v850 = vpop.f32.mrb[0].mxu0
    %v851 = vadd.f32 0.0, %v850
    %852 = vmatprep.mubr.f32.mxu0 %v559
    %853 = vmatmul.mubr.f32.gmra.mrb[0].mxu0 %v558
    %v854 = vpop.f32.mrb[0].mxu0
    %v855 = vadd.f32 0.0, %v854
    %v856 = vpop.f32.mrb[0].mxu0
    %v857 = vadd.f32 0.0, %v856
    %858 = vdwg.mxu0
    %859 = vmatprep.subr.mxu0 %v83
    %860 = vmatpush1.msra.mxu0 %v82
    %861 = vmatprep.subr.mxu0 %v85
    %862 = vmatpush1.msra.mxu0 %v84
    %863 = vmatprep.subr.mxu0 %v87
    %864 = vmatpush1.msra.mxu0 %v86
    %865 = vmatprep.subr.mxu0 %v89
    %866 = vmatpush1.msra.mxu0 %v88
    %867 = vmatprep.subr.mxu0 %v91
    %868 = vmatpush1.msra.mxu0 %v90
    %869 = vmatprep.subr.mxu0 %v93
    %870 = vmatpush1.msra.mxu0 %v92
    %871 = vmatprep.subr.mxu0 %v95
    %872 = vmatpush1.msra.mxu0 %v94
    %873 = vmatprep.subr.mxu0 %v97
    %874 = vmatpush1.msra.mxu0 %v96
    %875 = vmatprep.subr.mxu0 %v99
    %876 = vmatpush1.msra.mxu0 %v98
    %877 = vmatprep.subr.mxu0 %v101
    %878 = vmatpush1.msra.mxu0 %v100
    %879 = vmatprep.subr.mxu0 %v103
    %880 = vmatpush1.msra.mxu0 %v102
    %881 = vmatprep.subr.mxu0 %v105
    %882 = vmatpush1.msra.mxu0 %v104
    %883 = vmatprep.subr.mxu0 %v107
    %884 = vmatpush1.msra.mxu0 %v106
    %885 = vmatprep.subr.mxu0 %v109
    %886 = vmatpush1.msra.mxu0 %v108
    %887 = vmatprep.subr.mxu0 %v111
    %888 = vmatpush1.msra.mxu0 %v110
    %889 = vmatprep.subr.mxu0 %v113
    %890 = vmatpush1.msra.mxu0 %v112
    %891 = vmatprep.subr.mxu0 %v115
    %892 = vmatpush1.msra.mxu0 %v114
    %893 = vmatprep.subr.mxu0 %v117
    %894 = vmatpush1.msra.mxu0 %v116
    %895 = vmatprep.subr.mxu0 %v119
    %896 = vmatpush1.msra.mxu0 %v118
    %897 = vmatprep.subr.mxu0 %v121
    %898 = vmatpush1.msra.mxu0 %v120
    %899 = vmatprep.subr.mxu0 %v123
    %900 = vmatpush1.msra.mxu0 %v122
    %901 = vmatprep.subr.mxu0 %v125
    %902 = vmatpush1.msra.mxu0 %v124
    %903 = vmatprep.subr.mxu0 %v127
    %904 = vmatpush1.msra.mxu0 %v126
    %905 = vmatprep.subr.mxu0 %v129
    %906 = vmatpush1.msra.mxu0 %v128
    %907 = vmatprep.subr.mxu0 %v131
    %908 = vmatpush1.msra.mxu0 %v130
    %909 = vmatprep.subr.mxu0 %v133
    %910 = vmatpush1.msra.mxu0 %v132
    %911 = vmatprep.subr.mxu0 %v135
    %912 = vmatpush1.msra.mxu0 %v134
    %913 = vmatprep.subr.mxu0 %v137
    %914 = vmatpush1.msra.mxu0 %v136
    %915 = vmatprep.subr.mxu0 %v139
    %916 = vmatpush1.msra.mxu0 %v138
    %917 = vmatprep.subr.mxu0 %v141
    %918 = vmatpush1.msra.mxu0 %v140
    %919 = vmatprep.subr.mxu0 %v143
    %920 = vmatpush1.msra.mxu0 %v142
    %921 = vmatprep.subr.mxu0 %v145
    %922 = vmatpush1.msra.mxu0 %v144
    %923 = vmatprep.mubr.f32.mxu0 %v321
    %924 = vmatmul.mubr.f32.gmra.mrb[0].mxu0 %v320
    %v925 = vpop.f32.mrb[0].mxu0
    %v926 = vadd.f32 %v711, %v925
    %v927 = vpop.f32.mrb[0].mxu0
    %v928 = vadd.f32 %v713, %v927
    %929 = vmatprep.mubr.f32.mxu0 %v331
    %930 = vmatmul.mubr.f32.gmra.mrb[0].mxu0 %v330
    %v931 = vpop.f32.mrb[0].mxu0
    %v932 = vadd.f32 %v717, %v931
    %v933 = vpop.f32.mrb[0].mxu0
    %v934 = vadd.f32 %v719, %v933
    %935 = vmatprep.mubr.f32.mxu0 %v341
    %936 = vmatmul.mubr.f32.gmra.mrb[0].mxu0 %v340
    %v937 = vpop.f32.mrb[0].mxu0
    %v938 = vadd.f32 %v723, %v937
    %v939 = vpop.f32.mrb[0].mxu0
    %v940 = vadd.f32 %v725, %v939
    %941 = vmatprep.mubr.f32.mxu0 %v351
    %942 = vmatmul.mubr.f32.gmra.mrb[0].mxu0 %v350
    %v943 = vpop.f32.mrb[0].mxu0
    %v944 = vadd.f32 %v729, %v943
    %v945 = vpop.f32.mrb[0].mxu0
    %v946 = vadd.f32 %v731, %v945
    %947 = vmatprep.mubr.f32.mxu0 %v361
    %948 = vmatmul.mubr.f32.gmra.mrb[0].mxu0 %v360
    %v949 = vpop.f32.mrb[0].mxu0
    %v950 = vadd.f32 %v735, %v949
    %v951 = vpop.f32.mrb[0].mxu0
    %v952 = vadd.f32 %v737, %v951
    %953 = vmatprep.mubr.f32.mxu0 %v371
    %954 = vmatmul.mubr.f32.gmra.mrb[0].mxu0 %v370
    %v955 = vpop.f32.mrb[0].mxu0
    %v956 = vadd.f32 %v741, %v955
    %v957 = vpop.f32.mrb[0].mxu0
    %v958 = vadd.f32 %v743, %v957
    %959 = vmatprep.mubr.f32.mxu0 %v381
    %960 = vmatmul.mubr.f32.gmra.mrb[0].mxu0 %v380
    %v961 = vpop.f32.mrb[0].mxu0
    %v962 = vadd.f32 %v747, %v961
    %v963 = vpop.f32.mrb[0].mxu0
    %v964 = vadd.f32 %v749, %v963
    %965 = vmatprep.mubr.f32.mxu0 %v391
    %966 = vmatmul.mubr.f32.gmra.mrb[0].mxu0 %v390
    %v967 = vpop.f32.mrb[0].mxu0
    %v968 = vadd.f32 %v753, %v967
    %v969 = vpop.f32.mrb[0].mxu0
    %v970 = vadd.f32 %v755, %v969
    %971 = vmatprep.mubr.f32.mxu0 %v401
    %972 = vmatmul.mubr.f32.gmra.mrb[0].mxu0 %v400
    %v973 = vpop.f32.mrb[0].mxu0
    %v974 = vadd.f32 %v759, %v973
    %v975 = vpop.f32.mrb[0].mxu0
    %v976 = vadd.f32 %v761, %v975
    %977 = vmatprep.mubr.f32.mxu0 %v411
    %978 = vmatmul.mubr.f32.gmra.mrb[0].mxu0 %v410
    %v979 = vpop.f32.mrb[0].mxu0
    %v980 = vadd.f32 %v765, %v979
    %v981 = vpop.f32.mrb[0].mxu0
    %v982 = vadd.f32 %v767, %v981
    %983 = vmatprep.mubr.f32.mxu0 %v421
    %984 = vmatmul.mubr.f32.gmra.mrb[0].mxu0 %v420
    %v985 = vpop.f32.mrb[0].mxu0
    %v986 = vadd.f32 %v771, %v985
    %v987 = vpop.f32.mrb[0].mxu0
    %v988 = vadd.f32 %v773, %v987
    %989 = vmatprep.mubr.f32.mxu0 %v431
    %990 = vmatmul.mubr.f32.gmra.mrb[0].mxu0 %v430
    %v991 = vpop.f32.mrb[0].mxu0
    %v992 = vadd.f32 %v777, %v991
    %v993 = vpop.f32.mrb[0].mxu0
    %v994 = vadd.f32 %v779, %v993
    %995 = vmatprep.mubr.f32.mxu0 %v441
    %996 = vmatmul.mubr.f32.gmra.mrb[0].mxu0 %v440
    %v997 = vpop.f32.mrb[0].mxu0
    %v998 = vadd.f32 %v783, %v997
    %v999 = vpop.f32.mrb[0].mxu0
    %v1000 = vadd.f32 %v785, %v999
    %1001 = vmatprep.mubr.f32.mxu0 %v451
    %1002 = vmatmul.mubr.f32.gmra.mrb[0].mxu0 %v450
    %v1003 = vpop.f32.mrb[0].mxu0
    %v1004 = vadd.f32 %v789, %v1003
    %v1005 = vpop.f32.mrb[0].mxu0
    %v1006 = vadd.f32 %v791, %v1005
    %1007 = vmatprep.mubr.f32.mxu0 %v461
    %1008 = vmatmul.mubr.f32.gmra.mrb[0].mxu0 %v460
    %v1009 = vpop.f32.mrb[0].mxu0
    %v1010 = vadd.f32 %v795, %v1009
    %v1011 = vpop.f32.mrb[0].mxu0
    %v1012 = vadd.f32 %v797, %v1011
    %1013 = vmatprep.mubr.f32.mxu0 %v471
    %1014 = vmatmul.mubr.f32.gmra.mrb[0].mxu0 %v470
    %v1015 = vpop.f32.mrb[0].mxu0
    %v1016 = vadd.f32 %v801, %v1015
    %v1017 = vpop.f32.mrb[0].mxu0
    %v1018 = vadd.f32 %v803, %v1017
    %1019 = vmatprep.mubr.f32.mxu0 %v481
    %1020 = vmatmul.mubr.f32.gmra.mrb[0].mxu0 %v480
    %v1021 = vpop.f32.mrb[0].mxu0
    %v1022 = vadd.f32 %v807, %v1021
    %v1023 = vpop.f32.mrb[0].mxu0
    %v1024 = vadd.f32 %v809, %v1023
    %1025 = vmatprep.mubr.f32.mxu0 %v491
    %1026 = vmatmul.mubr.f32.gmra.mrb[0].mxu0 %v490
    %v1027 = vpop.f32.mrb[0].mxu0
    %v1028 = vadd.f32 %v813, %v1027
    %v1029 = vpop.f32.mrb[0].mxu0
    %v1030 = vadd.f32 %v815, %v1029
    %1031 = vmatprep.mubr.f32.mxu0 %v501
    %1032 = vmatmul.mubr.f32.gmra.mrb[0].mxu0 %v500
    %v1033 = vpop.f32.mrb[0].mxu0
    %v1034 = vadd.f32 %v819, %v1033
    %v1035 = vpop.f32.mrb[0].mxu0
    %v1036 = vadd.f32 %v821, %v1035
    %1037 = vmatprep.mubr.f32.mxu0 %v511
    %1038 = vmatmul.mubr.f32.gmra.mrb[0].mxu0 %v510
    %v1039 = vpop.f32.mrb[0].mxu0
    %v1040 = vadd.f32 %v825, %v1039
    %v1041 = vpop.f32.mrb[0].mxu0
    %v1042 = vadd.f32 %v827, %v1041
    %1043 = vmatprep.mubr.f32.mxu0 %v521
    %1044 = vmatmul.mubr.f32.gmra.mrb[0].mxu0 %v520
    %v1045 = vpop.f32.mrb[0].mxu0
    %v1046 = vadd.f32 %v831, %v1045
    %v1047 = vpop.f32.mrb[0].mxu0
    %v1048 = vadd.f32 %v833, %v1047
    %1049 = vmatprep.mubr.f32.mxu0 %v531
    %1050 = vmatmul.mubr.f32.gmra.mrb[0].mxu0 %v530
    %v1051 = vpop.f32.mrb[0].mxu0
    %v1052 = vadd.f32 %v837, %v1051
    %v1053 = vpop.f32.mrb[0].mxu0
    %v1054 = vadd.f32 %v839, %v1053
    %1055 = vmatprep.mubr.f32.mxu0 %v541
    %1056 = vmatmul.mubr.f32.gmra.mrb[0].mxu0 %v540
    %v1057 = vpop.f32.mrb[0].mxu0
    %v1058 = vadd.f32 %v843, %v1057
    %v1059 = vpop.f32.mrb[0].mxu0
    %v1060 = vadd.f32 %v845, %v1059
    %1061 = vmatprep.mubr.f32.mxu0 %v551
    %1062 = vmatmul.mubr.f32.gmra.mrb[0].mxu0 %v550
    %v1063 = vpop.f32.mrb[0].mxu0
    %v1064 = vadd.f32 %v849, %v1063
    %v1065 = vpop.f32.mrb[0].mxu0
    %v1066 = vadd.f32 %v851, %v1065
    %1067 = vmatprep.mubr.f32.mxu0 %v561
    %1068 = vmatmul.mubr.f32.gmra.mrb[0].mxu0 %v560
    %v1069 = vpop.f32.mrb[0].mxu0
    %v1070 = vadd.f32 %v855, %v1069
    %v1071 = vpop.f32.mrb[0].mxu0
    %v1072 = vadd.f32 %v857, %v1071
    %1073 = vdwg.mxu0
    %1074 = vmatprep.subr.mxu0 %v147
    %1075 = vmatpush1.msra.mxu0 %v146
    %1076 = vmatprep.subr.mxu0 %v149
    %1077 = vmatpush1.msra.mxu0 %v148
    %1078 = vmatprep.subr.mxu0 %v151
    %1079 = vmatpush1.msra.mxu0 %v150
    %1080 = vmatprep.subr.mxu0 %v153
    %1081 = vmatpush1.msra.mxu0 %v152
    %1082 = vmatprep.subr.mxu0 %v155
    %1083 = vmatpush1.msra.mxu0 %v154
    %1084 = vmatprep.subr.mxu0 %v157
    %1085 = vmatpush1.msra.mxu0 %v156
    %1086 = vmatprep.subr.mxu0 %v159
    %1087 = vmatpush1.msra.mxu0 %v158
    %1088 = vmatprep.subr.mxu0 %v161
    %1089 = vmatpush1.msra.mxu0 %v160
    %1090 = vmatprep.subr.mxu0 %v163
    %1091 = vmatpush1.msra.mxu0 %v162
    %1092 = vmatprep.subr.mxu0 %v165
    %1093 = vmatpush1.msra.mxu0 %v164
    %1094 = vmatprep.subr.mxu0 %v167
    %1095 = vmatpush1.msra.mxu0 %v166
    %1096 = vmatprep.subr.mxu0 %v169
    %1097 = vmatpush1.msra.mxu0 %v168
    %1098 = vmatprep.subr.mxu0 %v171
    %1099 = vmatpush1.msra.mxu0 %v170
    %1100 = vmatprep.subr.mxu0 %v173
    %1101 = vmatpush1.msra.mxu0 %v172
    %1102 = vmatprep.subr.mxu0 %v175
    %1103 = vmatpush1.msra.mxu0 %v174
    %1104 = vmatprep.subr.mxu0 %v177
    %1105 = vmatpush1.msra.mxu0 %v176
    %1106 = vmatprep.subr.mxu0 %v179
    %1107 = vmatpush1.msra.mxu0 %v178
    %1108 = vmatprep.subr.mxu0 %v181
    %1109 = vmatpush1.msra.mxu0 %v180
    %1110 = vmatprep.subr.mxu0 %v183
    %1111 = vmatpush1.msra.mxu0 %v182
    %1112 = vmatprep.subr.mxu0 %v185
    %1113 = vmatpush1.msra.mxu0 %v184
    %1114 = vmatprep.subr.mxu0 %v187
    %1115 = vmatpush1.msra.mxu0 %v186
    %1116 = vmatprep.subr.mxu0 %v189
    %1117 = vmatpush1.msra.mxu0 %v188
    %1118 = vmatprep.subr.mxu0 %v191
    %1119 = vmatpush1.msra.mxu0 %v190
    %1120 = vmatprep.subr.mxu0 %v193
    %1121 = vmatpush1.msra.mxu0 %v192
    %1122 = vmatprep.subr.mxu0 %v195
    %1123 = vmatpush1.msra.mxu0 %v194
    %1124 = vmatprep.subr.mxu0 %v197
    %1125 = vmatpush1.msra.mxu0 %v196
    %1126 = vmatprep.subr.mxu0 %v199
    %1127 = vmatpush1.msra.mxu0 %v198
    %1128 = vmatprep.subr.mxu0 %v201
    %1129 = vmatpush1.msra.mxu0 %v200
    %1130 = vmatprep.subr.mxu0 %v203
    %1131 = vmatpush1.msra.mxu0 %v202
    %1132 = vmatprep.subr.mxu0 %v205
    %1133 = vmatpush1.msra.mxu0 %v204
    %1134 = vmatprep.subr.mxu0 %v207
    %1135 = vmatpush1.msra.mxu0 %v206
    %1136 = vmatprep.subr.mxu0 %v209
    %1137 = vmatpush1.msra.mxu0 %v208
    %1138 = vmatprep.mubr.f32.mxu0 %v323
    %1139 = vmatmul.mubr.f32.gmra.mrb[0].mxu0 %v322
    %v1140 = vpop.f32.mrb[0].mxu0
    %v1141 = vadd.f32 %v926, %v1140
    %v1142 = vpop.f32.mrb[0].mxu0
    %v1143 = vadd.f32 %v928, %v1142
    %1144 = vmatprep.mubr.f32.mxu0 %v333
    %1145 = vmatmul.mubr.f32.gmra.mrb[0].mxu0 %v332
    %v1146 = vpop.f32.mrb[0].mxu0
    %v1147 = vadd.f32 %v932, %v1146
    %v1148 = vpop.f32.mrb[0].mxu0
    %v1149 = vadd.f32 %v934, %v1148
    %1150 = vmatprep.mubr.f32.mxu0 %v343
    %1151 = vmatmul.mubr.f32.gmra.mrb[0].mxu0 %v342
    %v1152 = vpop.f32.mrb[0].mxu0
    %v1153 = vadd.f32 %v938, %v1152
    %v1154 = vpop.f32.mrb[0].mxu0
    %v1155 = vadd.f32 %v940, %v1154
    %1156 = vmatprep.mubr.f32.mxu0 %v353
    %1157 = vmatmul.mubr.f32.gmra.mrb[0].mxu0 %v352
    %v1158 = vpop.f32.mrb[0].mxu0
    %v1159 = vadd.f32 %v944, %v1158
    %v1160 = vpop.f32.mrb[0].mxu0
    %v1161 = vadd.f32 %v946, %v1160
    %1162 = vmatprep.mubr.f32.mxu0 %v363
    %1163 = vmatmul.mubr.f32.gmra.mrb[0].mxu0 %v362
    %v1164 = vpop.f32.mrb[0].mxu0
    %v1165 = vadd.f32 %v950, %v1164
    %v1166 = vpop.f32.mrb[0].mxu0
    %v1167 = vadd.f32 %v952, %v1166
    %1168 = vmatprep.mubr.f32.mxu0 %v373
    %1169 = vmatmul.mubr.f32.gmra.mrb[0].mxu0 %v372
    %v1170 = vpop.f32.mrb[0].mxu0
    %v1171 = vadd.f32 %v956, %v1170
    %v1172 = vpop.f32.mrb[0].mxu0
    %v1173 = vadd.f32 %v958, %v1172
    %1174 = vmatprep.mubr.f32.mxu0 %v383
    %1175 = vmatmul.mubr.f32.gmra.mrb[0].mxu0 %v382
    %v1176 = vpop.f32.mrb[0].mxu0
    %v1177 = vadd.f32 %v962, %v1176
    %v1178 = vpop.f32.mrb[0].mxu0
    %v1179 = vadd.f32 %v964, %v1178
    %1180 = vmatprep.mubr.f32.mxu0 %v393
    %1181 = vmatmul.mubr.f32.gmra.mrb[0].mxu0 %v392
    %v1182 = vpop.f32.mrb[0].mxu0
    %v1183 = vadd.f32 %v968, %v1182
    %v1184 = vpop.f32.mrb[0].mxu0
    %v1185 = vadd.f32 %v970, %v1184
    %1186 = vmatprep.mubr.f32.mxu0 %v403
    %1187 = vmatmul.mubr.f32.gmra.mrb[0].mxu0 %v402
    %v1188 = vpop.f32.mrb[0].mxu0
    %v1189 = vadd.f32 %v974, %v1188
    %v1190 = vpop.f32.mrb[0].mxu0
    %v1191 = vadd.f32 %v976, %v1190
    %1192 = vmatprep.mubr.f32.mxu0 %v413
    %1193 = vmatmul.mubr.f32.gmra.mrb[0].mxu0 %v412
    %v1194 = vpop.f32.mrb[0].mxu0
    %v1195 = vadd.f32 %v980, %v1194
    %v1196 = vpop.f32.mrb[0].mxu0
    %v1197 = vadd.f32 %v982, %v1196
    %1198 = vmatprep.mubr.f32.mxu0 %v423
    %1199 = vmatmul.mubr.f32.gmra.mrb[0].mxu0 %v422
    %v1200 = vpop.f32.mrb[0].mxu0
    %v1201 = vadd.f32 %v986, %v1200
    %v1202 = vpop.f32.mrb[0].mxu0
    %v1203 = vadd.f32 %v988, %v1202
    %1204 = vmatprep.mubr.f32.mxu0 %v433
    %1205 = vmatmul.mubr.f32.gmra.mrb[0].mxu0 %v432
    %v1206 = vpop.f32.mrb[0].mxu0
    %v1207 = vadd.f32 %v992, %v1206
    %v1208 = vpop.f32.mrb[0].mxu0
    %v1209 = vadd.f32 %v994, %v1208
    %1210 = vmatprep.mubr.f32.mxu0 %v443
    %1211 = vmatmul.mubr.f32.gmra.mrb[0].mxu0 %v442
    %v1212 = vpop.f32.mrb[0].mxu0
    %v1213 = vadd.f32 %v998, %v1212
    %v1214 = vpop.f32.mrb[0].mxu0
    %v1215 = vadd.f32 %v1000, %v1214
    %1216 = vmatprep.mubr.f32.mxu0 %v453
    %1217 = vmatmul.mubr.f32.gmra.mrb[0].mxu0 %v452
    %v1218 = vpop.f32.mrb[0].mxu0
    %v1219 = vadd.f32 %v1004, %v1218
    %v1220 = vpop.f32.mrb[0].mxu0
    %v1221 = vadd.f32 %v1006, %v1220
    %1222 = vmatprep.mubr.f32.mxu0 %v463
    %1223 = vmatmul.mubr.f32.gmra.mrb[0].mxu0 %v462
    %v1224 = vpop.f32.mrb[0].mxu0
    %v1225 = vadd.f32 %v1010, %v1224
    %v1226 = vpop.f32.mrb[0].mxu0
    %v1227 = vadd.f32 %v1012, %v1226
    %1228 = vmatprep.mubr.f32.mxu0 %v473
    %1229 = vmatmul.mubr.f32.gmra.mrb[0].mxu0 %v472
    %v1230 = vpop.f32.mrb[0].mxu0
    %v1231 = vadd.f32 %v1016, %v1230
    %v1232 = vpop.f32.mrb[0].mxu0
    %v1233 = vadd.f32 %v1018, %v1232
    %1234 = vmatprep.mubr.f32.mxu0 %v483
    %1235 = vmatmul.mubr.f32.gmra.mrb[0].mxu0 %v482
    %v1236 = vpop.f32.mrb[0].mxu0
    %v1237 = vadd.f32 %v1022, %v1236
    %v1238 = vpop.f32.mrb[0].mxu0
    %v1239 = vadd.f32 %v1024, %v1238
    %1240 = vmatprep.mubr.f32.mxu0 %v493
    %1241 = vmatmul.mubr.f32.gmra.mrb[0].mxu0 %v492
    %v1242 = vpop.f32.mrb[0].mxu0
    %v1243 = vadd.f32 %v1028, %v1242
    %v1244 = vpop.f32.mrb[0].mxu0
    %v1245 = vadd.f32 %v1030, %v1244
    %1246 = vmatprep.mubr.f32.mxu0 %v503
    %1247 = vmatmul.mubr.f32.gmra.mrb[0].mxu0 %v502
    %v1248 = vpop.f32.mrb[0].mxu0
    %v1249 = vadd.f32 %v1034, %v1248
    %v1250 = vpop.f32.mrb[0].mxu0
    %v1251 = vadd.f32 %v1036, %v1250
    %1252 = vmatprep.mubr.f32.mxu0 %v513
    %1253 = vmatmul.mubr.f32.gmra.mrb[0].mxu0 %v512
    %v1254 = vpop.f32.mrb[0].mxu0
    %v1255 = vadd.f32 %v1040, %v1254
    %v1256 = vpop.f32.mrb[0].mxu0
    %v1257 = vadd.f32 %v1042, %v1256
    %1258 = vmatprep.mubr.f32.mxu0 %v523
    %1259 = vmatmul.mubr.f32.gmra.mrb[0].mxu0 %v522
    %v1260 = vpop.f32.mrb[0].mxu0
    %v1261 = vadd.f32 %v1046, %v1260
    %v1262 = vpop.f32.mrb[0].mxu0
    %v1263 = vadd.f32 %v1048, %v1262
    %1264 = vmatprep.mubr.f32.mxu0 %v533
    %1265 = vmatmul.mubr.f32.gmra.mrb[0].mxu0 %v532
    %v1266 = vpop.f32.mrb[0].mxu0
    %v1267 = vadd.f32 %v1052, %v1266
    %v1268 = vpop.f32.mrb[0].mxu0
    %v1269 = vadd.f32 %v1054, %v1268
    %1270 = vmatprep.mubr.f32.mxu0 %v543
    %1271 = vmatmul.mubr.f32.gmra.mrb[0].mxu0 %v542
    %v1272 = vpop.f32.mrb[0].mxu0
    %v1273 = vadd.f32 %v1058, %v1272
    %v1274 = vpop.f32.mrb[0].mxu0
    %v1275 = vadd.f32 %v1060, %v1274
    %1276 = vmatprep.mubr.f32.mxu0 %v553
    %1277 = vmatmul.mubr.f32.gmra.mrb[0].mxu0 %v552
    %v1278 = vpop.f32.mrb[0].mxu0
    %v1279 = vadd.f32 %v1064, %v1278
    %v1280 = vpop.f32.mrb[0].mxu0
    %v1281 = vadd.f32 %v1066, %v1280
    %1282 = vmatprep.mubr.f32.mxu0 %v563
    %1283 = vmatmul.mubr.f32.gmra.mrb[0].mxu0 %v562
    %v1284 = vpop.f32.mrb[0].mxu0
    %v1285 = vadd.f32 %v1070, %v1284
    %v1286 = vpop.f32.mrb[0].mxu0
    %v1287 = vadd.f32 %v1072, %v1286
    %1288 = vdwg.mxu0
    %1289 = vmatprep.subr.mxu0 %v211
    %1290 = vmatpush1.msra.mxu0 %v210
    %1291 = vmatprep.subr.mxu0 %v213
    %1292 = vmatpush1.msra.mxu0 %v212
    %1293 = vmatprep.subr.mxu0 %v215
    %1294 = vmatpush1.msra.mxu0 %v214
    %1295 = vmatprep.subr.mxu0 %v217
    %1296 = vmatpush1.msra.mxu0 %v216
    %1297 = vmatprep.subr.mxu0 %v219
    %1298 = vmatpush1.msra.mxu0 %v218
    %1299 = vmatprep.subr.mxu0 %v221
    %1300 = vmatpush1.msra.mxu0 %v220
    %1301 = vmatprep.subr.mxu0 %v223
    %1302 = vmatpush1.msra.mxu0 %v222
    %1303 = vmatprep.subr.mxu0 %v225
    %1304 = vmatpush1.msra.mxu0 %v224
    %1305 = vmatprep.subr.mxu0 %v227
    %1306 = vmatpush1.msra.mxu0 %v226
    %1307 = vmatprep.subr.mxu0 %v229
    %1308 = vmatpush1.msra.mxu0 %v228
    %1309 = vmatprep.subr.mxu0 %v231
    %1310 = vmatpush1.msra.mxu0 %v230
    %1311 = vmatprep.subr.mxu0 %v233
    %1312 = vmatpush1.msra.mxu0 %v232
    %1313 = vmatprep.subr.mxu0 %v235
    %1314 = vmatpush1.msra.mxu0 %v234
    %1315 = vmatprep.subr.mxu0 %v237
    %1316 = vmatpush1.msra.mxu0 %v236
    %1317 = vmatprep.subr.mxu0 %v239
    %1318 = vmatpush1.msra.mxu0 %v238
    %1319 = vmatprep.subr.mxu0 %v241
    %1320 = vmatpush1.msra.mxu0 %v240
    %1321 = vmatprep.subr.mxu0 %v243
    %1322 = vmatpush1.msra.mxu0 %v242
    %1323 = vmatprep.subr.mxu0 %v245
    %1324 = vmatpush1.msra.mxu0 %v244
    %1325 = vmatprep.subr.mxu0 %v247
    %1326 = vmatpush1.msra.mxu0 %v246
    %1327 = vmatprep.subr.mxu0 %v249
    %1328 = vmatpush1.msra.mxu0 %v248
    %1329 = vmatprep.subr.mxu0 %v251
    %1330 = vmatpush1.msra.mxu0 %v250
    %1331 = vmatprep.subr.mxu0 %v253
    %1332 = vmatpush1.msra.mxu0 %v252
    %1333 = vmatprep.subr.mxu0 %v255
    %1334 = vmatpush1.msra.mxu0 %v254
    %1335 = vmatprep.subr.mxu0 %v257
    %1336 = vmatpush1.msra.mxu0 %v256
    %1337 = vmatprep.subr.mxu0 %v259
    %1338 = vmatpush1.msra.mxu0 %v258
    %1339 = vmatprep.subr.mxu0 %v261
    %1340 = vmatpush1.msra.mxu0 %v260
    %1341 = vmatprep.subr.mxu0 %v263
    %1342 = vmatpush1.msra.mxu0 %v262
    %1343 = vmatprep.subr.mxu0 %v265
    %1344 = vmatpush1.msra.mxu0 %v264
    %1345 = vmatprep.subr.mxu0 %v267
    %1346 = vmatpush1.msra.mxu0 %v266
    %1347 = vmatprep.subr.mxu0 %v269
    %1348 = vmatpush1.msra.mxu0 %v268
    %1349 = vmatprep.subr.mxu0 %v271
    %1350 = vmatpush1.msra.mxu0 %v270
    %1351 = vmatprep.subr.mxu0 %v273
    %1352 = vmatpush1.msra.mxu0 %v272
    %1353 = vmatprep.mubr.f32.mxu0 %v325
    %1354 = vmatmul.mubr.f32.gmra.mrb[0].mxu0 %v324
    %v1355 = vpop.f32.mrb[0].mxu0
    %v1356 = vadd.f32 %v1141, %v1355
    %v1357 = vpop.f32.mrb[0].mxu0
    %v1358 = vadd.f32 %v1143, %v1357
    %1359 = vmatprep.mubr.f32.mxu0 %v335
    %1360 = vmatmul.mubr.f32.gmra.mrb[0].mxu0 %v334
    %v1361 = vpop.f32.mrb[0].mxu0
    %v1362 = vadd.f32 %v1147, %v1361
    %v1363 = vpop.f32.mrb[0].mxu0
    %v1364 = vadd.f32 %v1149, %v1363
    %1365 = vmatprep.mubr.f32.mxu0 %v345
    %1366 = vmatmul.mubr.f32.gmra.mrb[0].mxu0 %v344
    %v1367 = vpop.f32.mrb[0].mxu0
    %v1368 = vadd.f32 %v1153, %v1367
    %v1369 = vpop.f32.mrb[0].mxu0
    %v1370 = vadd.f32 %v1155, %v1369
    %1371 = vmatprep.mubr.f32.mxu0 %v355
    %1372 = vmatmul.mubr.f32.gmra.mrb[0].mxu0 %v354
    %v1373 = vpop.f32.mrb[0].mxu0
    %v1374 = vadd.f32 %v1159, %v1373
    %v1375 = vpop.f32.mrb[0].mxu0
    %v1376 = vadd.f32 %v1161, %v1375
    %1377 = vmatprep.mubr.f32.mxu0 %v365
    %1378 = vmatmul.mubr.f32.gmra.mrb[0].mxu0 %v364
    %v1379 = vpop.f32.mrb[0].mxu0
    %v1380 = vadd.f32 %v1165, %v1379
    %v1381 = vpop.f32.mrb[0].mxu0
    %v1382 = vadd.f32 %v1167, %v1381
    %1383 = vmatprep.mubr.f32.mxu0 %v375
    %1384 = vmatmul.mubr.f32.gmra.mrb[0].mxu0 %v374
    %v1385 = vpop.f32.mrb[0].mxu0
    %v1386 = vadd.f32 %v1171, %v1385
    %v1387 = vpop.f32.mrb[0].mxu0
    %v1388 = vadd.f32 %v1173, %v1387
    %1389 = vmatprep.mubr.f32.mxu0 %v385
    %1390 = vmatmul.mubr.f32.gmra.mrb[0].mxu0 %v384
    %v1391 = vpop.f32.mrb[0].mxu0
    %v1392 = vadd.f32 %v1177, %v1391
    %v1393 = vpop.f32.mrb[0].mxu0
    %v1394 = vadd.f32 %v1179, %v1393
    %1395 = vmatprep.mubr.f32.mxu0 %v395
    %1396 = vmatmul.mubr.f32.gmra.mrb[0].mxu0 %v394
    %v1397 = vpop.f32.mrb[0].mxu0
    %v1398 = vadd.f32 %v1183, %v1397
    %v1399 = vpop.f32.mrb[0].mxu0
    %v1400 = vadd.f32 %v1185, %v1399
    %1401 = vmatprep.mubr.f32.mxu0 %v405
    %1402 = vmatmul.mubr.f32.gmra.mrb[0].mxu0 %v404
    %v1403 = vpop.f32.mrb[0].mxu0
    %v1404 = vadd.f32 %v1189, %v1403
    %v1405 = vpop.f32.mrb[0].mxu0
    %v1406 = vadd.f32 %v1191, %v1405
    %1407 = vmatprep.mubr.f32.mxu0 %v415
    %1408 = vmatmul.mubr.f32.gmra.mrb[0].mxu0 %v414
    %v1409 = vpop.f32.mrb[0].mxu0
    %v1410 = vadd.f32 %v1195, %v1409
    %v1411 = vpop.f32.mrb[0].mxu0
    %v1412 = vadd.f32 %v1197, %v1411
    %1413 = vmatprep.mubr.f32.mxu0 %v425
    %1414 = vmatmul.mubr.f32.gmra.mrb[0].mxu0 %v424
    %v1415 = vpop.f32.mrb[0].mxu0
    %v1416 = vadd.f32 %v1201, %v1415
    %v1417 = vpop.f32.mrb[0].mxu0
    %v1418 = vadd.f32 %v1203, %v1417
    %1419 = vmatprep.mubr.f32.mxu0 %v435
    %1420 = vmatmul.mubr.f32.gmra.mrb[0].mxu0 %v434
    %v1421 = vpop.f32.mrb[0].mxu0
    %v1422 = vadd.f32 %v1207, %v1421
    %v1423 = vpop.f32.mrb[0].mxu0
    %v1424 = vadd.f32 %v1209, %v1423
    %1425 = vmatprep.mubr.f32.mxu0 %v445
    %1426 = vmatmul.mubr.f32.gmra.mrb[0].mxu0 %v444
    %v1427 = vpop.f32.mrb[0].mxu0
    %v1428 = vadd.f32 %v1213, %v1427
    %v1429 = vpop.f32.mrb[0].mxu0
    %v1430 = vadd.f32 %v1215, %v1429
    %1431 = vmatprep.mubr.f32.mxu0 %v455
    %1432 = vmatmul.mubr.f32.gmra.mrb[0].mxu0 %v454
    %v1433 = vpop.f32.mrb[0].mxu0
    %v1434 = vadd.f32 %v1219, %v1433
    %v1435 = vpop.f32.mrb[0].mxu0
    %v1436 = vadd.f32 %v1221, %v1435
    %1437 = vmatprep.mubr.f32.mxu0 %v465
    %1438 = vmatmul.mubr.f32.gmra.mrb[0].mxu0 %v464
    %v1439 = vpop.f32.mrb[0].mxu0
    %v1440 = vadd.f32 %v1225, %v1439
    %v1441 = vpop.f32.mrb[0].mxu0
    %v1442 = vadd.f32 %v1227, %v1441
    %1443 = vmatprep.mubr.f32.mxu0 %v475
    %1444 = vmatmul.mubr.f32.gmra.mrb[0].mxu0 %v474
    %v1445 = vpop.f32.mrb[0].mxu0
    %v1446 = vadd.f32 %v1231, %v1445
    %v1447 = vpop.f32.mrb[0].mxu0
    %v1448 = vadd.f32 %v1233, %v1447
    %1449 = vmatprep.mubr.f32.mxu0 %v485
    %1450 = vmatmul.mubr.f32.gmra.mrb[0].mxu0 %v484
    %v1451 = vpop.f32.mrb[0].mxu0
    %v1452 = vadd.f32 %v1237, %v1451
    %v1453 = vpop.f32.mrb[0].mxu0
    %v1454 = vadd.f32 %v1239, %v1453
    %1455 = vmatprep.mubr.f32.mxu0 %v495
    %1456 = vmatmul.mubr.f32.gmra.mrb[0].mxu0 %v494
    %v1457 = vpop.f32.mrb[0].mxu0
    %v1458 = vadd.f32 %v1243, %v1457
    %v1459 = vpop.f32.mrb[0].mxu0
    %v1460 = vadd.f32 %v1245, %v1459
    %1461 = vmatprep.mubr.f32.mxu0 %v505
    %1462 = vmatmul.mubr.f32.gmra.mrb[0].mxu0 %v504
    %v1463 = vpop.f32.mrb[0].mxu0
    %v1464 = vadd.f32 %v1249, %v1463
    %v1465 = vpop.f32.mrb[0].mxu0
    %v1466 = vadd.f32 %v1251, %v1465
    %1467 = vmatprep.mubr.f32.mxu0 %v515
    %1468 = vmatmul.mubr.f32.gmra.mrb[0].mxu0 %v514
    %v1469 = vpop.f32.mrb[0].mxu0
    %v1470 = vadd.f32 %v1255, %v1469
    %v1471 = vpop.f32.mrb[0].mxu0
    %v1472 = vadd.f32 %v1257, %v1471
    %1473 = vmatprep.mubr.f32.mxu0 %v525
    %1474 = vmatmul.mubr.f32.gmra.mrb[0].mxu0 %v524
    %v1475 = vpop.f32.mrb[0].mxu0
    %v1476 = vadd.f32 %v1261, %v1475
    %v1477 = vpop.f32.mrb[0].mxu0
    %v1478 = vadd.f32 %v1263, %v1477
    %1479 = vmatprep.mubr.f32.mxu0 %v535
    %1480 = vmatmul.mubr.f32.gmra.mrb[0].mxu0 %v534
    %v1481 = vpop.f32.mrb[0].mxu0
    %v1482 = vadd.f32 %v1267, %v1481
    %v1483 = vpop.f32.mrb[0].mxu0
    %v1484 = vadd.f32 %v1269, %v1483
    %1485 = vmatprep.mubr.f32.mxu0 %v545
    %1486 = vmatmul.mubr.f32.gmra.mrb[0].mxu0 %v544
    %v1487 = vpop.f32.mrb[0].mxu0
    %v1488 = vadd.f32 %v1273, %v1487
    %v1489 = vpop.f32.mrb[0].mxu0
    %v1490 = vadd.f32 %v1275, %v1489
    %1491 = vmatprep.mubr.f32.mxu0 %v555
    %1492 = vmatmul.mubr.f32.gmra.mrb[0].mxu0 %v554
    %v1493 = vpop.f32.mrb[0].mxu0
    %v1494 = vadd.f32 %v1279, %v1493
    %v1495 = vpop.f32.mrb[0].mxu0
    %v1496 = vadd.f32 %v1281, %v1495
    %1497 = vmatprep.mubr.f32.mxu0 %v565
    %1498 = vmatmul.mubr.f32.gmra.mrb[0].mxu0 %v564
    %v1499 = vpop.f32.mrb[0].mxu0
    %v1500 = vadd.f32 %v1285, %v1499
    %v1501 = vpop.f32.mrb[0].mxu0
    %v1502 = vadd.f32 %v1287, %v1501
    %1503 = vdwg.mxu0
    %1504 = vmatprep.subr.mxu0 %v275
    %1505 = vmatpush1.msra.mxu0 %v274
    %1506 = vmatprep.subr.mxu0 %v277
    %1507 = vmatpush1.msra.mxu0 %v276
    %1508 = vmatprep.subr.mxu0 %v279
    %1509 = vmatpush1.msra.mxu0 %v278
    %1510 = vmatprep.subr.mxu0 %v281
    %1511 = vmatpush1.msra.mxu0 %v280
    %1512 = vmatprep.subr.mxu0 %v283
    %1513 = vmatpush1.msra.mxu0 %v282
    %1514 = vmatprep.subr.mxu0 %v285
    %1515 = vmatpush1.msra.mxu0 %v284
    %1516 = vmatprep.subr.mxu0 %v287
    %1517 = vmatpush1.msra.mxu0 %v286
    %1518 = vmatprep.subr.mxu0 %v289
    %1519 = vmatpush1.msra.mxu0 %v288
    %1520 = vmatprep.subr.mxu0 %v291
    %1521 = vmatpush1.msra.mxu0 %v290
    %1522 = vmatprep.subr.mxu0 %v293
    %1523 = vmatpush1.msra.mxu0 %v292
    %1524 = vmatprep.subr.mxu0 %v295
    %1525 = vmatpush1.msra.mxu0 %v294
    %1526 = vmatprep.subr.mxu0 %v297
    %1527 = vmatpush1.msra.mxu0 %v296
    %1528 = vmatprep.subr.mxu0 %v299
    %1529 = vmatpush1.msra.mxu0 %v298
    %1530 = vmatprep.subr.mxu0 %v301
    %1531 = vmatpush1.msra.mxu0 %v300
    %1532 = vmatprep.subr.mxu0 %v303
    %1533 = vmatpush1.msra.mxu0 %v302
    %1534 = vmatprep.subr.mxu0 %v305
    %1535 = vmatpush1.msra.mxu0 %v304
    %1536 = vmatprep.subr.mxu0 %v307
    %1537 = vmatpush1.msra.mxu0 %v306
    %1538 = vmatprep.subr.mxu0 %v309
    %1539 = vmatpush1.msra.mxu0 %v308
    %1540 = vmatprep.subr.mxu0 %v311
    %1541 = vmatpush1.msra.mxu0 %v310
    %1542 = vmatprep.subr.mxu0 %v313
    %1543 = vmatpush1.msra.mxu0 %v312
    %1544 = vmatprep.subr.mxu0 %v315
    %1545 = vmatpush1.msra.mxu0 %v314
    %1546 = vmatprep.subr.mxu0 %v317
    %1547 = vmatpush1.msra.mxu0 %v316
    %1548 = vmatprep.subr.mxu0 0.0
    %1549 = vmatpush1.msra.mxu0 0.0
    %1550 = vmatprep.subr.mxu0 0.0
    %1551 = vmatpush1.msra.mxu0 0.0
    %1552 = vmatprep.subr.mxu0 0.0
    %1553 = vmatpush1.msra.mxu0 0.0
    %1554 = vmatprep.subr.mxu0 0.0
    %1555 = vmatpush1.msra.mxu0 0.0
    %1556 = vmatprep.subr.mxu0 0.0
    %1557 = vmatpush1.msra.mxu0 0.0
    %1558 = vmatprep.subr.mxu0 0.0
    %1559 = vmatpush1.msra.mxu0 0.0
    %1560 = vmatprep.subr.mxu0 0.0
    %1561 = vmatpush1.msra.mxu0 0.0
    %1562 = vmatprep.subr.mxu0 0.0
    %1563 = vmatpush1.msra.mxu0 0.0
    %1564 = vmatprep.subr.mxu0 0.0
    %1565 = vmatpush1.msra.mxu0 0.0
    %1566 = vmatprep.subr.mxu0 0.0
    %1567 = vmatpush1.msra.mxu0 0.0
    %1568 = vmatprep.mubr.f32.mxu0 %v570
    %1569 = vmatmul.mubr.f32.gmra.mrb[0].mxu0 %v326
    %v1570 = vpop.f32.mrb[0].mxu0
    %v1571 = vadd.f32 %v1356, %v1570
    %v1572 = vpop.f32.mrb[0].mxu0
    %v1573 = vadd.f32 %v1358, %v1572
    %1574 = vmatprep.mubr.f32.mxu0 %v573
    %1575 = vmatmul.mubr.f32.gmra.mrb[0].mxu0 %v336
    %v1576 = vpop.f32.mrb[0].mxu0
    %v1577 = vadd.f32 %v1362, %v1576
    %v1578 = vpop.f32.mrb[0].mxu0
    %v1579 = vadd.f32 %v1364, %v1578
    %1580 = vmatprep.mubr.f32.mxu0 %v576
    %1581 = vmatmul.mubr.f32.gmra.mrb[0].mxu0 %v346
    %v1582 = vpop.f32.mrb[0].mxu0
    %v1583 = vadd.f32 %v1368, %v1582
    %v1584 = vpop.f32.mrb[0].mxu0
    %v1585 = vadd.f32 %v1370, %v1584
    %1586 = vmatprep.mubr.f32.mxu0 %v579
    %1587 = vmatmul.mubr.f32.gmra.mrb[0].mxu0 %v356
    %v1588 = vpop.f32.mrb[0].mxu0
    %v1589 = vadd.f32 %v1374, %v1588
    %v1590 = vpop.f32.mrb[0].mxu0
    %v1591 = vadd.f32 %v1376, %v1590
    %1592 = vmatprep.mubr.f32.mxu0 %v582
    %1593 = vmatmul.mubr.f32.gmra.mrb[0].mxu0 %v366
    %v1594 = vpop.f32.mrb[0].mxu0
    %v1595 = vadd.f32 %v1380, %v1594
    %v1596 = vpop.f32.mrb[0].mxu0
    %v1597 = vadd.f32 %v1382, %v1596
    %1598 = vmatprep.mubr.f32.mxu0 %v585
    %1599 = vmatmul.mubr.f32.gmra.mrb[0].mxu0 %v376
    %v1600 = vpop.f32.mrb[0].mxu0
    %v1601 = vadd.f32 %v1386, %v1600
    %v1602 = vpop.f32.mrb[0].mxu0
    %v1603 = vadd.f32 %v1388, %v1602
    %1604 = vmatprep.mubr.f32.mxu0 %v588
    %1605 = vmatmul.mubr.f32.gmra.mrb[0].mxu0 %v386
    %v1606 = vpop.f32.mrb[0].mxu0
    %v1607 = vadd.f32 %v1392, %v1606
    %v1608 = vpop.f32.mrb[0].mxu0
    %v1609 = vadd.f32 %v1394, %v1608
    %1610 = vmatprep.mubr.f32.mxu0 %v591
    %1611 = vmatmul.mubr.f32.gmra.mrb[0].mxu0 %v396
    %v1612 = vpop.f32.mrb[0].mxu0
    %v1613 = vadd.f32 %v1398, %v1612
    %v1614 = vpop.f32.mrb[0].mxu0
    %v1615 = vadd.f32 %v1400, %v1614
    %1616 = vmatprep.mubr.f32.mxu0 %v594
    %1617 = vmatmul.mubr.f32.gmra.mrb[0].mxu0 %v406
    %v1618 = vpop.f32.mrb[0].mxu0
    %v1619 = vadd.f32 %v1404, %v1618
    %v1620 = vpop.f32.mrb[0].mxu0
    %v1621 = vadd.f32 %v1406, %v1620
    %1622 = vmatprep.mubr.f32.mxu0 %v597
    %1623 = vmatmul.mubr.f32.gmra.mrb[0].mxu0 %v416
    %v1624 = vpop.f32.mrb[0].mxu0
    %v1625 = vadd.f32 %v1410, %v1624
    %v1626 = vpop.f32.mrb[0].mxu0
    %v1627 = vadd.f32 %v1412, %v1626
    %1628 = vmatprep.mubr.f32.mxu0 %v600
    %1629 = vmatmul.mubr.f32.gmra.mrb[0].mxu0 %v426
    %v1630 = vpop.f32.mrb[0].mxu0
    %v1631 = vadd.f32 %v1416, %v1630
    %v1632 = vpop.f32.mrb[0].mxu0
    %v1633 = vadd.f32 %v1418, %v1632
    %1634 = vmatprep.mubr.f32.mxu0 %v603
    %1635 = vmatmul.mubr.f32.gmra.mrb[0].mxu0 %v436
    %v1636 = vpop.f32.mrb[0].mxu0
    %v1637 = vadd.f32 %v1422, %v1636
    %v1638 = vpop.f32.mrb[0].mxu0
    %v1639 = vadd.f32 %v1424, %v1638
    %1640 = vmatprep.mubr.f32.mxu0 %v606
    %1641 = vmatmul.mubr.f32.gmra.mrb[0].mxu0 %v446
    %v1642 = vpop.f32.mrb[0].mxu0
    %v1643 = vadd.f32 %v1428, %v1642
    %v1644 = vpop.f32.mrb[0].mxu0
    %v1645 = vadd.f32 %v1430, %v1644
    %1646 = vmatprep.mubr.f32.mxu0 %v609
    %1647 = vmatmul.mubr.f32.gmra.mrb[0].mxu0 %v456
    %v1648 = vpop.f32.mrb[0].mxu0
    %v1649 = vadd.f32 %v1434, %v1648
    %v1650 = vpop.f32.mrb[0].mxu0
    %v1651 = vadd.f32 %v1436, %v1650
    %1652 = vmatprep.mubr.f32.mxu0 %v612
    %1653 = vmatmul.mubr.f32.gmra.mrb[0].mxu0 %v466
    %v1654 = vpop.f32.mrb[0].mxu0
    %v1655 = vadd.f32 %v1440, %v1654
    %v1656 = vpop.f32.mrb[0].mxu0
    %v1657 = vadd.f32 %v1442, %v1656
    %1658 = vmatprep.mubr.f32.mxu0 %v615
    %1659 = vmatmul.mubr.f32.gmra.mrb[0].mxu0 %v476
    %v1660 = vpop.f32.mrb[0].mxu0
    %v1661 = vadd.f32 %v1446, %v1660
    %v1662 = vpop.f32.mrb[0].mxu0
    %v1663 = vadd.f32 %v1448, %v1662
    %1664 = vmatprep.mubr.f32.mxu0 %v618
    %1665 = vmatmul.mubr.f32.gmra.mrb[0].mxu0 %v486
    %v1666 = vpop.f32.mrb[0].mxu0
    %v1667 = vadd.f32 %v1452, %v1666
    %v1668 = vpop.f32.mrb[0].mxu0
    %v1669 = vadd.f32 %v1454, %v1668
    %1670 = vmatprep.mubr.f32.mxu0 %v621
    %1671 = vmatmul.mubr.f32.gmra.mrb[0].mxu0 %v496
    %v1672 = vpop.f32.mrb[0].mxu0
    %v1673 = vadd.f32 %v1458, %v1672
    %v1674 = vpop.f32.mrb[0].mxu0
    %v1675 = vadd.f32 %v1460, %v1674
    %1676 = vmatprep.mubr.f32.mxu0 %v624
    %1677 = vmatmul.mubr.f32.gmra.mrb[0].mxu0 %v506
    %v1678 = vpop.f32.mrb[0].mxu0
    %v1679 = vadd.f32 %v1464, %v1678
    %v1680 = vpop.f32.mrb[0].mxu0
    %v1681 = vadd.f32 %v1466, %v1680
    %1682 = vmatprep.mubr.f32.mxu0 %v627
    %1683 = vmatmul.mubr.f32.gmra.mrb[0].mxu0 %v516
    %v1684 = vpop.f32.mrb[0].mxu0
    %v1685 = vadd.f32 %v1470, %v1684
    %v1686 = vpop.f32.mrb[0].mxu0
    %v1687 = vadd.f32 %v1472, %v1686
    %1688 = vmatprep.mubr.f32.mxu0 %v630
    %1689 = vmatmul.mubr.f32.gmra.mrb[0].mxu0 %v526
    %v1690 = vpop.f32.mrb[0].mxu0
    %v1691 = vadd.f32 %v1476, %v1690
    %v1692 = vpop.f32.mrb[0].mxu0
    %v1693 = vadd.f32 %v1478, %v1692
    %1694 = vmatprep.mubr.f32.mxu0 %v633
    %1695 = vmatmul.mubr.f32.gmra.mrb[0].mxu0 %v536
    %v1696 = vpop.f32.mrb[0].mxu0
    %v1697 = vadd.f32 %v1482, %v1696
    %v1698 = vpop.f32.mrb[0].mxu0
    %v1699 = vadd.f32 %v1484, %v1698
    %1700 = vmatprep.mubr.f32.mxu0 %v636
    %1701 = vmatmul.mubr.f32.gmra.mrb[0].mxu0 %v546
    %v1702 = vpop.f32.mrb[0].mxu0
    %v1703 = vadd.f32 %v1488, %v1702
    %v1704 = vpop.f32.mrb[0].mxu0
    %v1705 = vadd.f32 %v1490, %v1704
    %1706 = vmatprep.mubr.f32.mxu0 %v639
    %1707 = vmatmul.mubr.f32.gmra.mrb[0].mxu0 %v556
    %v1708 = vpop.f32.mrb[0].mxu0
    %v1709 = vadd.f32 %v1494, %v1708
    %v1710 = vpop.f32.mrb[0].mxu0
    %v1711 = vadd.f32 %v1496, %v1710
    %1712 = vmatprep.mubr.f32.mxu0 %v642
    %1713 = vmatmul.mubr.f32.gmra.mrb[0].mxu0 %v566
    %v1714 = vpop.f32.mrb[0].mxu0
    %v1715 = vadd.f32 %v1500, %v1714
    %v1716 = vpop.f32.mrb[0].mxu0
    %v1717 = vadd.f32 %v1502, %v1716
    %1718 = vdwg.mxu0
    %vm1719 = vcmask 556032
    %v1720 = vsel %vm1719, %v1573, 0.0
    %v1721 = vadd.f32 %v1571, %v1720
    %1722 = vadd.xlane.f32.xlu0 %v1721
    %v1723 = vpop.xlane.xlu0 %1722
    %v1724 = vsel %vm1719, %v1579, 0.0
    %v1725 = vadd.f32 %v1577, %v1724
    %1726 = vadd.xlane.f32.xlu0 %v1725
    %v1727 = vpop.xlane.xlu0 %1726
    %v1728 = vsel %vm1719, %v1585, 0.0
    %v1729 = vadd.f32 %v1583, %v1728
    %1730 = vadd.xlane.f32.xlu0 %v1729
    %v1731 = vpop.xlane.xlu0 %1730
    %v1732 = vsel %vm1719, %v1591, 0.0
    %v1733 = vadd.f32 %v1589, %v1732
    %1734 = vadd.xlane.f32.xlu0 %v1733
    %v1735 = vpop.xlane.xlu0 %1734
    %v1736 = vsel %vm1719, %v1597, 0.0
    %v1737 = vadd.f32 %v1595, %v1736
    %1738 = vadd.xlane.f32.xlu0 %v1737
    %v1739 = vpop.xlane.xlu0 %1738
    %v1740 = vsel %vm1719, %v1603, 0.0
    %v1741 = vadd.f32 %v1601, %v1740
    %1742 = vadd.xlane.f32.xlu0 %v1741
    %v1743 = vpop.xlane.xlu0 %1742
    %v1744 = vsel %vm1719, %v1609, 0.0
    %v1745 = vadd.f32 %v1607, %v1744
    %1746 = vadd.xlane.f32.xlu0 %v1745
    %v1747 = vpop.xlane.xlu0 %1746
    %v1748 = vsel %vm1719, %v1615, 0.0
    %v1749 = vadd.f32 %v1613, %v1748
    %1750 = vadd.xlane.f32.xlu0 %v1749
    %v1751 = vpop.xlane.xlu0 %1750
    %v1752 = vsel %vm1719, %v1621, 0.0
    %v1753 = vadd.f32 %v1619, %v1752
    %1754 = vadd.xlane.f32.xlu0 %v1753
    %v1755 = vpop.xlane.xlu0 %1754
    %v1756 = vsel %vm1719, %v1627, 0.0
    %v1757 = vadd.f32 %v1625, %v1756
    %1758 = vadd.xlane.f32.xlu0 %v1757
    %v1759 = vpop.xlane.xlu0 %1758
    %v1760 = vsel %vm1719, %v1633, 0.0
    %v1761 = vadd.f32 %v1631, %v1760
    %1762 = vadd.xlane.f32.xlu0 %v1761
    %v1763 = vpop.xlane.xlu0 %1762
    %v1764 = vsel %vm1719, %v1639, 0.0
    %v1765 = vadd.f32 %v1637, %v1764
    %1766 = vadd.xlane.f32.xlu0 %v1765
    %v1767 = vpop.xlane.xlu0 %1766
    %v1768 = vsel %vm1719, %v1645, 0.0
    %v1769 = vadd.f32 %v1643, %v1768
    %1770 = vadd.xlane.f32.xlu0 %v1769
    %v1771 = vpop.xlane.xlu0 %1770
    %v1772 = vsel %vm1719, %v1651, 0.0
    %v1773 = vadd.f32 %v1649, %v1772
    %1774 = vadd.xlane.f32.xlu0 %v1773
    %v1775 = vpop.xlane.xlu0 %1774
    %v1776 = vsel %vm1719, %v1657, 0.0
    %v1777 = vadd.f32 %v1655, %v1776
    %1778 = vadd.xlane.f32.xlu0 %v1777
    %v1779 = vpop.xlane.xlu0 %1778
    %v1780 = vsel %vm1719, %v1663, 0.0
    %v1781 = vadd.f32 %v1661, %v1780
    %1782 = vadd.xlane.f32.xlu0 %v1781
    %v1783 = vpop.xlane.xlu0 %1782
    %v1784 = vsel %vm1719, %v1669, 0.0
    %v1785 = vadd.f32 %v1667, %v1784
    %1786 = vadd.xlane.f32.xlu0 %v1785
    %v1787 = vpop.xlane.xlu0 %1786
    %v1788 = vsel %vm1719, %v1675, 0.0
    %v1789 = vadd.f32 %v1673, %v1788
    %1790 = vadd.xlane.f32.xlu0 %v1789
    %v1791 = vpop.xlane.xlu0 %1790
    %v1792 = vsel %vm1719, %v1681, 0.0
    %v1793 = vadd.f32 %v1679, %v1792
    %1794 = vadd.xlane.f32.xlu0 %v1793
    %v1795 = vpop.xlane.xlu0 %1794
    %v1796 = vsel %vm1719, %v1687, 0.0
    %v1797 = vadd.f32 %v1685, %v1796
    %1798 = vadd.xlane.f32.xlu0 %v1797
    %v1799 = vpop.xlane.xlu0 %1798
    %v1800 = vsel %vm1719, %v1693, 0.0
    %v1801 = vadd.f32 %v1691, %v1800
    %1802 = vadd.xlane.f32.xlu0 %v1801
    %v1803 = vpop.xlane.xlu0 %1802
    %v1804 = vsel %vm1719, %v1699, 0.0
    %v1805 = vadd.f32 %v1697, %v1804
    %1806 = vadd.xlane.f32.xlu0 %v1805
    %v1807 = vpop.xlane.xlu0 %1806
    %v1808 = vsel %vm1719, %v1705, 0.0
    %v1809 = vadd.f32 %v1703, %v1808
    %1810 = vadd.xlane.f32.xlu0 %v1809
    %v1811 = vpop.xlane.xlu0 %1810
    %v1812 = vsel %vm1719, %v1711, 0.0
    %v1813 = vadd.f32 %v1709, %v1812
    %1814 = vadd.xlane.f32.xlu0 %v1813
    %v1815 = vpop.xlane.xlu0 %1814
    %v1816 = vsel %vm1719, %v1717, 0.0
    %v1817 = vadd.f32 %v1715, %v1816
    %1818 = vadd.xlane.f32.xlu0 %v1817
    %v1819 = vpop.xlane.xlu0 %1818
    %v1820 = vmul.f32 %v1571, %v1571
    %v1821 = vmul.f32 %v1573, %v1573
    %v1822 = vmul.f32 %v1577, %v1577
    %v1823 = vmul.f32 %v1579, %v1579
    %v1824 = vmul.f32 %v1583, %v1583
    %v1825 = vmul.f32 %v1585, %v1585
    %v1826 = vmul.f32 %v1589, %v1589
    %v1827 = vmul.f32 %v1591, %v1591
    %v1828 = vmul.f32 %v1595, %v1595
    %v1829 = vmul.f32 %v1597, %v1597
    %v1830 = vmul.f32 %v1601, %v1601
    %v1831 = vmul.f32 %v1603, %v1603
    %v1832 = vmul.f32 %v1607, %v1607
    %v1833 = vmul.f32 %v1609, %v1609
    %v1834 = vmul.f32 %v1613, %v1613
    %v1835 = vmul.f32 %v1615, %v1615
    %v1836 = vmul.f32 %v1619, %v1619
    %v1837 = vmul.f32 %v1621, %v1621
    %v1838 = vmul.f32 %v1625, %v1625
    %v1839 = vmul.f32 %v1627, %v1627
    %v1840 = vmul.f32 %v1631, %v1631
    %v1841 = vmul.f32 %v1633, %v1633
    %v1842 = vmul.f32 %v1637, %v1637
    %v1843 = vmul.f32 %v1639, %v1639
    %v1844 = vmul.f32 %v1643, %v1643
    %v1845 = vmul.f32 %v1645, %v1645
    %v1846 = vmul.f32 %v1649, %v1649
    %v1847 = vmul.f32 %v1651, %v1651
    %v1848 = vmul.f32 %v1655, %v1655
    %v1849 = vmul.f32 %v1657, %v1657
    %v1850 = vmul.f32 %v1661, %v1661
    %v1851 = vmul.f32 %v1663, %v1663
    %v1852 = vmul.f32 %v1667, %v1667
    %v1853 = vmul.f32 %v1669, %v1669
    %v1854 = vmul.f32 %v1673, %v1673
    %v1855 = vmul.f32 %v1675, %v1675
    %v1856 = vmul.f32 %v1679, %v1679
    %v1857 = vmul.f32 %v1681, %v1681
    %v1858 = vmul.f32 %v1685, %v1685
    %v1859 = vmul.f32 %v1687, %v1687
    %v1860 = vmul.f32 %v1691, %v1691
    %v1861 = vmul.f32 %v1693, %v1693
    %v1862 = vmul.f32 %v1697, %v1697
    %v1863 = vmul.f32 %v1699, %v1699
    %v1864 = vmul.f32 %v1703, %v1703
    %v1865 = vmul.f32 %v1705, %v1705
    %v1866 = vmul.f32 %v1709, %v1709
    %v1867 = vmul.f32 %v1711, %v1711
    %v1868 = vmul.f32 %v1715, %v1715
    %v1869 = vmul.f32 %v1717, %v1717
    %v1870 = vsel %vm1719, %v1821, 0.0
    %v1871 = vadd.f32 %v1820, %v1870
    %1872 = vadd.xlane.f32.xlu0 %v1871
    %v1873 = vpop.xlane.xlu0 %1872
    %v1874 = vsel %vm1719, %v1823, 0.0
    %v1875 = vadd.f32 %v1822, %v1874
    %1876 = vadd.xlane.f32.xlu0 %v1875
    %v1877 = vpop.xlane.xlu0 %1876
    %v1878 = vsel %vm1719, %v1825, 0.0
    %v1879 = vadd.f32 %v1824, %v1878
    %1880 = vadd.xlane.f32.xlu0 %v1879
    %v1881 = vpop.xlane.xlu0 %1880
    %v1882 = vsel %vm1719, %v1827, 0.0
    %v1883 = vadd.f32 %v1826, %v1882
    %1884 = vadd.xlane.f32.xlu0 %v1883
    %v1885 = vpop.xlane.xlu0 %1884
    %v1886 = vsel %vm1719, %v1829, 0.0
    %v1887 = vadd.f32 %v1828, %v1886
    %1888 = vadd.xlane.f32.xlu0 %v1887
    %v1889 = vpop.xlane.xlu0 %1888
    %v1890 = vsel %vm1719, %v1831, 0.0
    %v1891 = vadd.f32 %v1830, %v1890
    %1892 = vadd.xlane.f32.xlu0 %v1891
    %v1893 = vpop.xlane.xlu0 %1892
    %v1894 = vsel %vm1719, %v1833, 0.0
    %v1895 = vadd.f32 %v1832, %v1894
    %1896 = vadd.xlane.f32.xlu0 %v1895
    %v1897 = vpop.xlane.xlu0 %1896
    %v1898 = vsel %vm1719, %v1835, 0.0
    %v1899 = vadd.f32 %v1834, %v1898
    %1900 = vadd.xlane.f32.xlu0 %v1899
    %v1901 = vpop.xlane.xlu0 %1900
    %v1902 = vsel %vm1719, %v1837, 0.0
    %v1903 = vadd.f32 %v1836, %v1902
    %1904 = vadd.xlane.f32.xlu0 %v1903
    %v1905 = vpop.xlane.xlu0 %1904
    %v1906 = vsel %vm1719, %v1839, 0.0
    %v1907 = vadd.f32 %v1838, %v1906
    %1908 = vadd.xlane.f32.xlu0 %v1907
    %v1909 = vpop.xlane.xlu0 %1908
    %v1910 = vsel %vm1719, %v1841, 0.0
    %v1911 = vadd.f32 %v1840, %v1910
    %1912 = vadd.xlane.f32.xlu0 %v1911
    %v1913 = vpop.xlane.xlu0 %1912
    %v1914 = vsel %vm1719, %v1843, 0.0
    %v1915 = vadd.f32 %v1842, %v1914
    %1916 = vadd.xlane.f32.xlu0 %v1915
    %v1917 = vpop.xlane.xlu0 %1916
    %v1918 = vsel %vm1719, %v1845, 0.0
    %v1919 = vadd.f32 %v1844, %v1918
    %1920 = vadd.xlane.f32.xlu0 %v1919
    %v1921 = vpop.xlane.xlu0 %1920
    %v1922 = vsel %vm1719, %v1847, 0.0
    %v1923 = vadd.f32 %v1846, %v1922
    %1924 = vadd.xlane.f32.xlu0 %v1923
    %v1925 = vpop.xlane.xlu0 %1924
    %v1926 = vsel %vm1719, %v1849, 0.0
    %v1927 = vadd.f32 %v1848, %v1926
    %1928 = vadd.xlane.f32.xlu0 %v1927
    %v1929 = vpop.xlane.xlu0 %1928
    %v1930 = vsel %vm1719, %v1851, 0.0
    %v1931 = vadd.f32 %v1850, %v1930
    %1932 = vadd.xlane.f32.xlu0 %v1931
    %v1933 = vpop.xlane.xlu0 %1932
    %v1934 = vsel %vm1719, %v1853, 0.0
    %v1935 = vadd.f32 %v1852, %v1934
    %1936 = vadd.xlane.f32.xlu0 %v1935
    %v1937 = vpop.xlane.xlu0 %1936
    %v1938 = vsel %vm1719, %v1855, 0.0
    %v1939 = vadd.f32 %v1854, %v1938
    %1940 = vadd.xlane.f32.xlu0 %v1939
    %v1941 = vpop.xlane.xlu0 %1940
    %v1942 = vsel %vm1719, %v1857, 0.0
    %v1943 = vadd.f32 %v1856, %v1942
    %1944 = vadd.xlane.f32.xlu0 %v1943
    %v1945 = vpop.xlane.xlu0 %1944
    %v1946 = vsel %vm1719, %v1859, 0.0
    %v1947 = vadd.f32 %v1858, %v1946
    %1948 = vadd.xlane.f32.xlu0 %v1947
    %v1949 = vpop.xlane.xlu0 %1948
    %v1950 = vsel %vm1719, %v1861, 0.0
    %v1951 = vadd.f32 %v1860, %v1950
    %1952 = vadd.xlane.f32.xlu0 %v1951
    %v1953 = vpop.xlane.xlu0 %1952
    %v1954 = vsel %vm1719, %v1863, 0.0
    %v1955 = vadd.f32 %v1862, %v1954
    %1956 = vadd.xlane.f32.xlu0 %v1955
    %v1957 = vpop.xlane.xlu0 %1956
    %v1958 = vsel %vm1719, %v1865, 0.0
    %v1959 = vadd.f32 %v1864, %v1958
    %1960 = vadd.xlane.f32.xlu0 %v1959
    %v1961 = vpop.xlane.xlu0 %1960
    %v1962 = vsel %vm1719, %v1867, 0.0
    %v1963 = vadd.f32 %v1866, %v1962
    %1964 = vadd.xlane.f32.xlu0 %v1963
    %v1965 = vpop.xlane.xlu0 %1964
    %v1966 = vsel %vm1719, %v1869, 0.0
    %v1967 = vadd.f32 %v1868, %v1966
    %1968 = vadd.xlane.f32.xlu0 %v1967
    %v1969 = vpop.xlane.xlu0 %1968
    %v1970 = vmul.f32 %v1723, 0.0051020407
    %v1971 = vmul.f32 %v1727, 0.0051020407
    %v1972 = vmul.f32 %v1731, 0.0051020407
    %v1973 = vmul.f32 %v1735, 0.0051020407
    %v1974 = vmul.f32 %v1739, 0.0051020407
    %v1975 = vmul.f32 %v1743, 0.0051020407
    %v1976 = vmul.f32 %v1747, 0.0051020407
    %v1977 = vmul.f32 %v1751, 0.0051020407
    %v1978 = vmul.f32 %v1755, 0.0051020407
    %v1979 = vmul.f32 %v1759, 0.0051020407
    %v1980 = vmul.f32 %v1763, 0.0051020407
    %v1981 = vmul.f32 %v1767, 0.0051020407
    %v1982 = vmul.f32 %v1771, 0.0051020407
    %v1983 = vmul.f32 %v1775, 0.0051020407
    %v1984 = vmul.f32 %v1779, 0.0051020407
    %v1985 = vmul.f32 %v1783, 0.0051020407
    %v1986 = vmul.f32 %v1787, 0.0051020407
    %v1987 = vmul.f32 %v1791, 0.0051020407
    %v1988 = vmul.f32 %v1795, 0.0051020407
    %v1989 = vmul.f32 %v1799, 0.0051020407
    %v1990 = vmul.f32 %v1803, 0.0051020407
    %v1991 = vmul.f32 %v1807, 0.0051020407
    %v1992 = vmul.f32 %v1811, 0.0051020407
    %v1993 = vmul.f32 %v1815, 0.0051020407
    %v1994 = vmul.f32 %v1819, 0.0051020407
    %v1995 = vmul.f32 %v1873, 0.0051020407
    %v1996 = vmul.f32 %v1877, 0.0051020407
    %v1997 = vmul.f32 %v1881, 0.0051020407
    %v1998 = vmul.f32 %v1885, 0.0051020407
    %v1999 = vmul.f32 %v1889, 0.0051020407
    %v2000 = vmul.f32 %v1893, 0.0051020407
    %v2001 = vmul.f32 %v1897, 0.0051020407
    %v2002 = vmul.f32 %v1901, 0.0051020407
    %v2003 = vmul.f32 %v1905, 0.0051020407
    %v2004 = vmul.f32 %v1909, 0.0051020407
    %v2005 = vmul.f32 %v1913, 0.0051020407
    %v2006 = vmul.f32 %v1917, 0.0051020407
    %v2007 = vmul.f32 %v1921, 0.0051020407
    %v2008 = vmul.f32 %v1925, 0.0051020407
    %v2009 = vmul.f32 %v1929, 0.0051020407
    %v2010 = vmul.f32 %v1933, 0.0051020407
    %v2011 = vmul.f32 %v1937, 0.0051020407
    %v2012 = vmul.f32 %v1941, 0.0051020407
    %v2013 = vmul.f32 %v1945, 0.0051020407
    %v2014 = vmul.f32 %v1949, 0.0051020407
    %v2015 = vmul.f32 %v1953, 0.0051020407
    %v2016 = vmul.f32 %v1957, 0.0051020407
    %v2017 = vmul.f32 %v1961, 0.0051020407
    %v2018 = vmul.f32 %v1965, 0.0051020407
    %v2019 = vmul.f32 %v1969, 0.0051020407
    %v2020 = vmul.f32 %v1970, %v1970
    %v2021 = vmul.f32 %v1971, %v1971
    %v2022 = vmul.f32 %v1972, %v1972
    %v2023 = vmul.f32 %v1973, %v1973
    %v2024 = vmul.f32 %v1974, %v1974
    %v2025 = vmul.f32 %v1975, %v1975
    %v2026 = vmul.f32 %v1976, %v1976
    %v2027 = vmul.f32 %v1977, %v1977
    %v2028 = vmul.f32 %v1978, %v1978
    %v2029 = vmul.f32 %v1979, %v1979
    %v2030 = vmul.f32 %v1980, %v1980
    %v2031 = vmul.f32 %v1981, %v1981
    %v2032 = vmul.f32 %v1982, %v1982
    %v2033 = vmul.f32 %v1983, %v1983
    %v2034 = vmul.f32 %v1984, %v1984
    %v2035 = vmul.f32 %v1985, %v1985
    %v2036 = vmul.f32 %v1986, %v1986
    %v2037 = vmul.f32 %v1987, %v1987
    %v2038 = vmul.f32 %v1988, %v1988
    %v2039 = vmul.f32 %v1989, %v1989
    %v2040 = vmul.f32 %v1990, %v1990
    %v2041 = vmul.f32 %v1991, %v1991
    %v2042 = vmul.f32 %v1992, %v1992
    %v2043 = vmul.f32 %v1993, %v1993
    %v2044 = vmul.f32 %v1994, %v1994
    %v2045 = vsub.f32 %v1995, %v2020
    %v2046 = vsub.f32 %v1996, %v2021
    %v2047 = vsub.f32 %v1997, %v2022
    %v2048 = vsub.f32 %v1998, %v2023
    %v2049 = vsub.f32 %v1999, %v2024
    %v2050 = vsub.f32 %v2000, %v2025
    %v2051 = vsub.f32 %v2001, %v2026
    %v2052 = vsub.f32 %v2002, %v2027
    %v2053 = vsub.f32 %v2003, %v2028
    %v2054 = vsub.f32 %v2004, %v2029
    %v2055 = vsub.f32 %v2005, %v2030
    %v2056 = vsub.f32 %v2006, %v2031
    %v2057 = vsub.f32 %v2007, %v2032
    %v2058 = vsub.f32 %v2008, %v2033
    %v2059 = vsub.f32 %v2009, %v2034
    %v2060 = vsub.f32 %v2010, %v2035
    %v2061 = vsub.f32 %v2011, %v2036
    %v2062 = vsub.f32 %v2012, %v2037
    %v2063 = vsub.f32 %v2013, %v2038
    %v2064 = vsub.f32 %v2014, %v2039
    %v2065 = vsub.f32 %v2015, %v2040
    %v2066 = vsub.f32 %v2016, %v2041
    %v2067 = vsub.f32 %v2017, %v2042
    %v2068 = vsub.f32 %v2018, %v2043
    %v2069 = vsub.f32 %v2019, %v2044
    %v2070 = vld [vmem:[%s2] sm:$0xff]
    %v2071 = vld [vmem:[%s2 + $0x8] sm:$0xff]
    %v2072 = vld [vmem:[%s2 + $0x10] sm:$0xff]
    %v2073 = vld [vmem:[%s2 + $0x18] sm:$0xff]
    %v2074 = vld [vmem:[%s2 + $0x20] sm:$0xff]
    %v2075 = vld [vmem:[%s2 + $0x28] sm:$0xff]
    %v2076 = vld [vmem:[%s2 + $0x30] sm:$0xff]
    %v2077 = vld [vmem:[%s2 + $0x38] sm:$0xff]
    %v2078 = vld [vmem:[%s2 + $0x40] sm:$0xff]
    %v2079 = vld [vmem:[%s2 + $0x48] sm:$0xff]
    %v2080 = vld [vmem:[%s2 + $0x50] sm:$0xff]
    %v2081 = vld [vmem:[%s2 + $0x58] sm:$0xff]
    %v2082 = vld [vmem:[%s2 + $0x60] sm:$0xff]
    %v2083 = vld [vmem:[%s2 + $0x68] sm:$0xff]
    %v2084 = vld [vmem:[%s2 + $0x70] sm:$0xff]
    %v2085 = vld [vmem:[%s2 + $0x78] sm:$0xff]
    %v2086 = vld [vmem:[%s2 + $0x80] sm:$0xff]
    %v2087 = vld [vmem:[%s2 + $0x88] sm:$0xff]
    %v2088 = vld [vmem:[%s2 + $0x90] sm:$0xff]
    %v2089 = vld [vmem:[%s2 + $0x98] sm:$0xff]
    %v2090 = vld [vmem:[%s2 + $0xa0] sm:$0xff]
    %v2091 = vld [vmem:[%s2 + $0xa8] sm:$0xff]
    %v2092 = vld [vmem:[%s2 + $0xb0] sm:$0xff]
    %v2093 = vld [vmem:[%s2 + $0xb8] sm:$0xff]
    %v2094 = vld [vmem:[%s2 + $0xc0] sm:$0xff]
    %v2095 = vadd.f32 %v2045, 0.001
    %v2096 = vadd.f32 %v2046, 0.001
    %v2097 = vadd.f32 %v2047, 0.001
    %v2098 = vadd.f32 %v2048, 0.001
    %v2099 = vadd.f32 %v2049, 0.001
    %v2100 = vadd.f32 %v2050, 0.001
    %v2101 = vadd.f32 %v2051, 0.001
    %v2102 = vadd.f32 %v2052, 0.001
    %v2103 = vadd.f32 %v2053, 0.001
    %v2104 = vadd.f32 %v2054, 0.001
    %v2105 = vadd.f32 %v2055, 0.001
    %v2106 = vadd.f32 %v2056, 0.001
    %v2107 = vadd.f32 %v2057, 0.001
    %v2108 = vadd.f32 %v2058, 0.001
    %v2109 = vadd.f32 %v2059, 0.001
    %v2110 = vadd.f32 %v2060, 0.001
    %v2111 = vadd.f32 %v2061, 0.001
    %v2112 = vadd.f32 %v2062, 0.001
    %v2113 = vadd.f32 %v2063, 0.001
    %v2114 = vadd.f32 %v2064, 0.001
    %v2115 = vadd.f32 %v2065, 0.001
    %v2116 = vadd.f32 %v2066, 0.001
    %v2117 = vadd.f32 %v2067, 0.001
    %v2118 = vadd.f32 %v2068, 0.001
    %v2119 = vadd.f32 %v2069, 0.001
    %v2120 = vrsqrt.pop %v2095
    %v2121 = vrsqrt.pop %v2096
    %v2122 = vrsqrt.pop %v2097
    %v2123 = vrsqrt.pop %v2098
    %v2124 = vrsqrt.pop %v2099
    %v2125 = vrsqrt.pop %v2100
    %v2126 = vrsqrt.pop %v2101
    %v2127 = vrsqrt.pop %v2102
    %v2128 = vrsqrt.pop %v2103
    %v2129 = vrsqrt.pop %v2104
    %v2130 = vrsqrt.pop %v2105
    %v2131 = vrsqrt.pop %v2106
    %v2132 = vrsqrt.pop %v2107
    %v2133 = vrsqrt.pop %v2108
    %v2134 = vrsqrt.pop %v2109
    %v2135 = vrsqrt.pop %v2110
    %v2136 = vrsqrt.pop %v2111
    %v2137 = vrsqrt.pop %v2112
    %v2138 = vrsqrt.pop %v2113
    %v2139 = vrsqrt.pop %v2114
    %v2140 = vrsqrt.pop %v2115
    %v2141 = vrsqrt.pop %v2116
    %v2142 = vrsqrt.pop %v2117
    %v2143 = vrsqrt.pop %v2118
    %v2144 = vrsqrt.pop %v2119
    %v2145 = vmul.f32 %v2070, %v2120
    %v2146 = vmul.f32 %v2071, %v2121
    %v2147 = vmul.f32 %v2072, %v2122
    %v2148 = vmul.f32 %v2073, %v2123
    %v2149 = vmul.f32 %v2074, %v2124
    %v2150 = vmul.f32 %v2075, %v2125
    %v2151 = vmul.f32 %v2076, %v2126
    %v2152 = vmul.f32 %v2077, %v2127
    %v2153 = vmul.f32 %v2078, %v2128
    %v2154 = vmul.f32 %v2079, %v2129
    %v2155 = vmul.f32 %v2080, %v2130
    %v2156 = vmul.f32 %v2081, %v2131
    %v2157 = vmul.f32 %v2082, %v2132
    %v2158 = vmul.f32 %v2083, %v2133
    %v2159 = vmul.f32 %v2084, %v2134
    %v2160 = vmul.f32 %v2085, %v2135
    %v2161 = vmul.f32 %v2086, %v2136
    %v2162 = vmul.f32 %v2087, %v2137
    %v2163 = vmul.f32 %v2088, %v2138
    %v2164 = vmul.f32 %v2089, %v2139
    %v2165 = vmul.f32 %v2090, %v2140
    %v2166 = vmul.f32 %v2091, %v2141
    %v2167 = vmul.f32 %v2092, %v2142
    %v2168 = vmul.f32 %v2093, %v2143
    %v2169 = vmul.f32 %v2094, %v2144
    %v2170 = vld [vmem:[%s3] sm:$0xff]
    %v2171 = vld [vmem:[%s3 + $0x8] sm:$0xff]
    %v2172 = vld [vmem:[%s3 + $0x10] sm:$0xff]
    %v2173 = vld [vmem:[%s3 + $0x18] sm:$0xff]
    %v2174 = vld [vmem:[%s3 + $0x20] sm:$0xff]
    %v2175 = vld [vmem:[%s3 + $0x28] sm:$0xff]
    %v2176 = vld [vmem:[%s3 + $0x30] sm:$0xff]
    %v2177 = vld [vmem:[%s3 + $0x38] sm:$0xff]
    %v2178 = vld [vmem:[%s3 + $0x40] sm:$0xff]
    %v2179 = vld [vmem:[%s3 + $0x48] sm:$0xff]
    %v2180 = vld [vmem:[%s3 + $0x50] sm:$0xff]
    %v2181 = vld [vmem:[%s3 + $0x58] sm:$0xff]
    %v2182 = vld [vmem:[%s3 + $0x60] sm:$0xff]
    %v2183 = vld [vmem:[%s3 + $0x68] sm:$0xff]
    %v2184 = vld [vmem:[%s3 + $0x70] sm:$0xff]
    %v2185 = vld [vmem:[%s3 + $0x78] sm:$0xff]
    %v2186 = vld [vmem:[%s3 + $0x80] sm:$0xff]
    %v2187 = vld [vmem:[%s3 + $0x88] sm:$0xff]
    %v2188 = vld [vmem:[%s3 + $0x90] sm:$0xff]
    %v2189 = vld [vmem:[%s3 + $0x98] sm:$0xff]
    %v2190 = vld [vmem:[%s3 + $0xa0] sm:$0xff]
    %v2191 = vld [vmem:[%s3 + $0xa8] sm:$0xff]
    %v2192 = vld [vmem:[%s3 + $0xb0] sm:$0xff]
    %v2193 = vld [vmem:[%s3 + $0xb8] sm:$0xff]
    %v2194 = vld [vmem:[%s3 + $0xc0] sm:$0xff]
    %v2195 = vmul.f32 %v1970, %v2145
    %v2196 = vmul.f32 %v1971, %v2146
    %v2197 = vmul.f32 %v1972, %v2147
    %v2198 = vmul.f32 %v1973, %v2148
    %v2199 = vmul.f32 %v1974, %v2149
    %v2200 = vmul.f32 %v1975, %v2150
    %v2201 = vmul.f32 %v1976, %v2151
    %v2202 = vmul.f32 %v1977, %v2152
    %v2203 = vmul.f32 %v1978, %v2153
    %v2204 = vmul.f32 %v1979, %v2154
    %v2205 = vmul.f32 %v1980, %v2155
    %v2206 = vmul.f32 %v1981, %v2156
    %v2207 = vmul.f32 %v1982, %v2157
    %v2208 = vmul.f32 %v1983, %v2158
    %v2209 = vmul.f32 %v1984, %v2159
    %v2210 = vmul.f32 %v1985, %v2160
    %v2211 = vmul.f32 %v1986, %v2161
    %v2212 = vmul.f32 %v1987, %v2162
    %v2213 = vmul.f32 %v1988, %v2163
    %v2214 = vmul.f32 %v1989, %v2164
    %v2215 = vmul.f32 %v1990, %v2165
    %v2216 = vmul.f32 %v1991, %v2166
    %v2217 = vmul.f32 %v1992, %v2167
    %v2218 = vmul.f32 %v1993, %v2168
    %v2219 = vmul.f32 %v1994, %v2169
    %v2220 = vsub.f32 %v2170, %v2195
    %v2221 = vsub.f32 %v2171, %v2196
    %v2222 = vsub.f32 %v2172, %v2197
    %v2223 = vsub.f32 %v2173, %v2198
    %v2224 = vsub.f32 %v2174, %v2199
    %v2225 = vsub.f32 %v2175, %v2200
    %v2226 = vsub.f32 %v2176, %v2201
    %v2227 = vsub.f32 %v2177, %v2202
    %v2228 = vsub.f32 %v2178, %v2203
    %v2229 = vsub.f32 %v2179, %v2204
    %v2230 = vsub.f32 %v2180, %v2205
    %v2231 = vsub.f32 %v2181, %v2206
    %v2232 = vsub.f32 %v2182, %v2207
    %v2233 = vsub.f32 %v2183, %v2208
    %v2234 = vsub.f32 %v2184, %v2209
    %v2235 = vsub.f32 %v2185, %v2210
    %v2236 = vsub.f32 %v2186, %v2211
    %v2237 = vsub.f32 %v2187, %v2212
    %v2238 = vsub.f32 %v2188, %v2213
    %v2239 = vsub.f32 %v2189, %v2214
    %v2240 = vsub.f32 %v2190, %v2215
    %v2241 = vsub.f32 %v2191, %v2216
    %v2242 = vsub.f32 %v2192, %v2217
    %v2243 = vsub.f32 %v2193, %v2218
    %v2244 = vsub.f32 %v2194, %v2219
    %2246 = vset.pattern.permute.xlu0 0
    %2247 = vperm.xlu0 %2246, %v2145
    %v2248 = vpop.permute.xlu0 %2247
    %2251 = vset.pattern.permute.xlu0 0
    %2252 = vperm.xlu0 %2251, %v2146
    %v2253 = vpop.permute.xlu0 %2252
    %2256 = vset.pattern.permute.xlu0 0
    %2257 = vperm.xlu0 %2256, %v2147
    %v2258 = vpop.permute.xlu0 %2257
    %2261 = vset.pattern.permute.xlu0 0
    %2262 = vperm.xlu0 %2261, %v2148
    %v2263 = vpop.permute.xlu0 %2262
    %2266 = vset.pattern.permute.xlu0 0
    %2267 = vperm.xlu0 %2266, %v2149
    %v2268 = vpop.permute.xlu0 %2267
    %2271 = vset.pattern.permute.xlu0 0
    %2272 = vperm.xlu0 %2271, %v2150
    %v2273 = vpop.permute.xlu0 %2272
    %2276 = vset.pattern.permute.xlu0 0
    %2277 = vperm.xlu0 %2276, %v2151
    %v2278 = vpop.permute.xlu0 %2277
    %2281 = vset.pattern.permute.xlu0 0
    %2282 = vperm.xlu0 %2281, %v2152
    %v2283 = vpop.permute.xlu0 %2282
    %2286 = vset.pattern.permute.xlu0 0
    %2287 = vperm.xlu0 %2286, %v2153
    %v2288 = vpop.permute.xlu0 %2287
    %2291 = vset.pattern.permute.xlu0 0
    %2292 = vperm.xlu0 %2291, %v2154
    %v2293 = vpop.permute.xlu0 %2292
    %2296 = vset.pattern.permute.xlu0 0
    %2297 = vperm.xlu0 %2296, %v2155
    %v2298 = vpop.permute.xlu0 %2297
    %2301 = vset.pattern.permute.xlu0 0
    %2302 = vperm.xlu0 %2301, %v2156
    %v2303 = vpop.permute.xlu0 %2302
    %2306 = vset.pattern.permute.xlu0 0
    %2307 = vperm.xlu0 %2306, %v2157
    %v2308 = vpop.permute.xlu0 %2307
    %2311 = vset.pattern.permute.xlu0 0
    %2312 = vperm.xlu0 %2311, %v2158
    %v2313 = vpop.permute.xlu0 %2312
    %2316 = vset.pattern.permute.xlu0 0
    %2317 = vperm.xlu0 %2316, %v2159
    %v2318 = vpop.permute.xlu0 %2317
    %2321 = vset.pattern.permute.xlu0 0
    %2322 = vperm.xlu0 %2321, %v2160
    %v2323 = vpop.permute.xlu0 %2322
    %2326 = vset.pattern.permute.xlu0 0
    %2327 = vperm.xlu0 %2326, %v2161
    %v2328 = vpop.permute.xlu0 %2327
    %2331 = vset.pattern.permute.xlu0 0
    %2332 = vperm.xlu0 %2331, %v2162
    %v2333 = vpop.permute.xlu0 %2332
    %2336 = vset.pattern.permute.xlu0 0
    %2337 = vperm.xlu0 %2336, %v2163
    %v2338 = vpop.permute.xlu0 %2337
    %2341 = vset.pattern.permute.xlu0 0
    %2342 = vperm.xlu0 %2341, %v2164
    %v2343 = vpop.permute.xlu0 %2342
    %2346 = vset.pattern.permute.xlu0 0
    %2347 = vperm.xlu0 %2346, %v2165
    %v2348 = vpop.permute.xlu0 %2347
    %2351 = vset.pattern.permute.xlu0 0
    %2352 = vperm.xlu0 %2351, %v2166
    %v2353 = vpop.permute.xlu0 %2352
    %2356 = vset.pattern.permute.xlu0 0
    %2357 = vperm.xlu0 %2356, %v2167
    %v2358 = vpop.permute.xlu0 %2357
    %2361 = vset.pattern.permute.xlu0 0
    %2362 = vperm.xlu0 %2361, %v2168
    %v2363 = vpop.permute.xlu0 %2362
    %2366 = vset.pattern.permute.xlu0 0
    %2367 = vperm.xlu0 %2366, %v2169
    %v2368 = vpop.permute.xlu0 %2367
    %v2370 = vmul.f32 %v1571, %v2248
    %v2371 = vmul.f32 %v1573, %v2248
    %v2372 = vmul.f32 %v1577, %v2253
    %v2373 = vmul.f32 %v1579, %v2253
    %v2374 = vmul.f32 %v1583, %v2258
    %v2375 = vmul.f32 %v1585, %v2258
    %v2376 = vmul.f32 %v1589, %v2263
    %v2377 = vmul.f32 %v1591, %v2263
    %v2378 = vmul.f32 %v1595, %v2268
    %v2379 = vmul.f32 %v1597, %v2268
    %v2380 = vmul.f32 %v1601, %v2273
    %v2381 = vmul.f32 %v1603, %v2273
    %v2382 = vmul.f32 %v1607, %v2278
    %v2383 = vmul.f32 %v1609, %v2278
    %v2384 = vmul.f32 %v1613, %v2283
    %v2385 = vmul.f32 %v1615, %v2283
    %v2386 = vmul.f32 %v1619, %v2288
    %v2387 = vmul.f32 %v1621, %v2288
    %v2388 = vmul.f32 %v1625, %v2293
    %v2389 = vmul.f32 %v1627, %v2293
    %v2390 = vmul.f32 %v1631, %v2298
    %v2391 = vmul.f32 %v1633, %v2298
    %v2392 = vmul.f32 %v1637, %v2303
    %v2393 = vmul.f32 %v1639, %v2303
    %v2394 = vmul.f32 %v1643, %v2308
    %v2395 = vmul.f32 %v1645, %v2308
    %v2396 = vmul.f32 %v1649, %v2313
    %v2397 = vmul.f32 %v1651, %v2313
    %v2398 = vmul.f32 %v1655, %v2318
    %v2399 = vmul.f32 %v1657, %v2318
    %v2400 = vmul.f32 %v1661, %v2323
    %v2401 = vmul.f32 %v1663, %v2323
    %v2402 = vmul.f32 %v1667, %v2328
    %v2403 = vmul.f32 %v1669, %v2328
    %v2404 = vmul.f32 %v1673, %v2333
    %v2405 = vmul.f32 %v1675, %v2333
    %v2406 = vmul.f32 %v1679, %v2338
    %v2407 = vmul.f32 %v1681, %v2338
    %v2408 = vmul.f32 %v1685, %v2343
    %v2409 = vmul.f32 %v1687, %v2343
    %v2410 = vmul.f32 %v1691, %v2348
    %v2411 = vmul.f32 %v1693, %v2348
    %v2412 = vmul.f32 %v1697, %v2353
    %v2413 = vmul.f32 %v1699, %v2353
    %v2414 = vmul.f32 %v1703, %v2358
    %v2415 = vmul.f32 %v1705, %v2358
    %v2416 = vmul.f32 %v1709, %v2363
    %v2417 = vmul.f32 %v1711, %v2363
    %v2418 = vmul.f32 %v1715, %v2368
    %v2419 = vmul.f32 %v1717, %v2368
    %2421 = vset.pattern.permute.xlu0 0
    %2422 = vperm.xlu0 %2421, %v2220
    %v2423 = vpop.permute.xlu0 %2422
    %2426 = vset.pattern.permute.xlu0 0
    %2427 = vperm.xlu0 %2426, %v2221
    %v2428 = vpop.permute.xlu0 %2427
    %2431 = vset.pattern.permute.xlu0 0
    %2432 = vperm.xlu0 %2431, %v2222
    %v2433 = vpop.permute.xlu0 %2432
    %2436 = vset.pattern.permute.xlu0 0
    %2437 = vperm.xlu0 %2436, %v2223
    %v2438 = vpop.permute.xlu0 %2437
    %2441 = vset.pattern.permute.xlu0 0
    %2442 = vperm.xlu0 %2441, %v2224
    %v2443 = vpop.permute.xlu0 %2442
    %2446 = vset.pattern.permute.xlu0 0
    %2447 = vperm.xlu0 %2446, %v2225
    %v2448 = vpop.permute.xlu0 %2447
    %2451 = vset.pattern.permute.xlu0 0
    %2452 = vperm.xlu0 %2451, %v2226
    %v2453 = vpop.permute.xlu0 %2452
    %2456 = vset.pattern.permute.xlu0 0
    %2457 = vperm.xlu0 %2456, %v2227
    %v2458 = vpop.permute.xlu0 %2457
    %2461 = vset.pattern.permute.xlu0 0
    %2462 = vperm.xlu0 %2461, %v2228
    %v2463 = vpop.permute.xlu0 %2462
    %2466 = vset.pattern.permute.xlu0 0
    %2467 = vperm.xlu0 %2466, %v2229
    %v2468 = vpop.permute.xlu0 %2467
    %2471 = vset.pattern.permute.xlu0 0
    %2472 = vperm.xlu0 %2471, %v2230
    %v2473 = vpop.permute.xlu0 %2472
    %2476 = vset.pattern.permute.xlu0 0
    %2477 = vperm.xlu0 %2476, %v2231
    %v2478 = vpop.permute.xlu0 %2477
    %2481 = vset.pattern.permute.xlu0 0
    %2482 = vperm.xlu0 %2481, %v2232
    %v2483 = vpop.permute.xlu0 %2482
    %2486 = vset.pattern.permute.xlu0 0
    %2487 = vperm.xlu0 %2486, %v2233
    %v2488 = vpop.permute.xlu0 %2487
    %2491 = vset.pattern.permute.xlu0 0
    %2492 = vperm.xlu0 %2491, %v2234
    %v2493 = vpop.permute.xlu0 %2492
    %2496 = vset.pattern.permute.xlu0 0
    %2497 = vperm.xlu0 %2496, %v2235
    %v2498 = vpop.permute.xlu0 %2497
    %2501 = vset.pattern.permute.xlu0 0
    %2502 = vperm.xlu0 %2501, %v2236
    %v2503 = vpop.permute.xlu0 %2502
    %2506 = vset.pattern.permute.xlu0 0
    %2507 = vperm.xlu0 %2506, %v2237
    %v2508 = vpop.permute.xlu0 %2507
    %2511 = vset.pattern.permute.xlu0 0
    %2512 = vperm.xlu0 %2511, %v2238
    %v2513 = vpop.permute.xlu0 %2512
    %2516 = vset.pattern.permute.xlu0 0
    %2517 = vperm.xlu0 %2516, %v2239
    %v2518 = vpop.permute.xlu0 %2517
    %2521 = vset.pattern.permute.xlu0 0
    %2522 = vperm.xlu0 %2521, %v2240
    %v2523 = vpop.permute.xlu0 %2522
    %2526 = vset.pattern.permute.xlu0 0
    %2527 = vperm.xlu0 %2526, %v2241
    %v2528 = vpop.permute.xlu0 %2527
    %2531 = vset.pattern.permute.xlu0 0
    %2532 = vperm.xlu0 %2531, %v2242
    %v2533 = vpop.permute.xlu0 %2532
    %2536 = vset.pattern.permute.xlu0 0
    %2537 = vperm.xlu0 %2536, %v2243
    %v2538 = vpop.permute.xlu0 %2537
    %2541 = vset.pattern.permute.xlu0 0
    %2542 = vperm.xlu0 %2541, %v2244
    %v2543 = vpop.permute.xlu0 %2542
    %v2545 = vadd.f32 %v2370, %v2423
    %v2546 = vadd.f32 %v2371, %v2423
    %v2547 = vadd.f32 %v2372, %v2428
    %v2548 = vadd.f32 %v2373, %v2428
    %v2549 = vadd.f32 %v2374, %v2433
    %v2550 = vadd.f32 %v2375, %v2433
    %v2551 = vadd.f32 %v2376, %v2438
    %v2552 = vadd.f32 %v2377, %v2438
    %v2553 = vadd.f32 %v2378, %v2443
    %v2554 = vadd.f32 %v2379, %v2443
    %v2555 = vadd.f32 %v2380, %v2448
    %v2556 = vadd.f32 %v2381, %v2448
    %v2557 = vadd.f32 %v2382, %v2453
    %v2558 = vadd.f32 %v2383, %v2453
    %v2559 = vadd.f32 %v2384, %v2458
    %v2560 = vadd.f32 %v2385, %v2458
    %v2561 = vadd.f32 %v2386, %v2463
    %v2562 = vadd.f32 %v2387, %v2463
    %v2563 = vadd.f32 %v2388, %v2468
    %v2564 = vadd.f32 %v2389, %v2468
    %v2565 = vadd.f32 %v2390, %v2473
    %v2566 = vadd.f32 %v2391, %v2473
    %v2567 = vadd.f32 %v2392, %v2478
    %v2568 = vadd.f32 %v2393, %v2478
    %v2569 = vadd.f32 %v2394, %v2483
    %v2570 = vadd.f32 %v2395, %v2483
    %v2571 = vadd.f32 %v2396, %v2488
    %v2572 = vadd.f32 %v2397, %v2488
    %v2573 = vadd.f32 %v2398, %v2493
    %v2574 = vadd.f32 %v2399, %v2493
    %v2575 = vadd.f32 %v2400, %v2498
    %v2576 = vadd.f32 %v2401, %v2498
    %v2577 = vadd.f32 %v2402, %v2503
    %v2578 = vadd.f32 %v2403, %v2503
    %v2579 = vadd.f32 %v2404, %v2508
    %v2580 = vadd.f32 %v2405, %v2508
    %v2581 = vadd.f32 %v2406, %v2513
    %v2582 = vadd.f32 %v2407, %v2513
    %v2583 = vadd.f32 %v2408, %v2518
    %v2584 = vadd.f32 %v2409, %v2518
    %v2585 = vadd.f32 %v2410, %v2523
    %v2586 = vadd.f32 %v2411, %v2523
    %v2587 = vadd.f32 %v2412, %v2528
    %v2588 = vadd.f32 %v2413, %v2528
    %v2589 = vadd.f32 %v2414, %v2533
    %v2590 = vadd.f32 %v2415, %v2533
    %v2591 = vadd.f32 %v2416, %v2538
    %v2592 = vadd.f32 %v2417, %v2538
    %v2593 = vadd.f32 %v2418, %v2543
    %v2594 = vadd.f32 %v2419, %v2543
    %2595 = vst [vmem:[#allocation2] sm:$0xff] %v2545
    %2596 = vst.msk [vmem:[#allocation2 + $0x8] sm:$0xff] %vm1719, %v2546
    %2597 = vst [vmem:[#allocation2 + $0x10] sm:$0xff] %v2547
    %2598 = vst.msk [vmem:[#allocation2 + $0x18] sm:$0xff] %vm1719, %v2548
    %2599 = vst [vmem:[#allocation2 + $0x20] sm:$0xff] %v2549
    %2600 = vst.msk [vmem:[#allocation2 + $0x28] sm:$0xff] %vm1719, %v2550
    %2601 = vst [vmem:[#allocation2 + $0x30] sm:$0xff] %v2551
    %2602 = vst.msk [vmem:[#allocation2 + $0x38] sm:$0xff] %vm1719, %v2552
    %2603 = vst [vmem:[#allocation2 + $0x40] sm:$0xff] %v2553
    %2604 = vst.msk [vmem:[#allocation2 + $0x48] sm:$0xff] %vm1719, %v2554
    %2605 = vst [vmem:[#allocation2 + $0x50] sm:$0xff] %v2555
    %2606 = vst.msk [vmem:[#allocation2 + $0x58] sm:$0xff] %vm1719, %v2556
    %2607 = vst [vmem:[#allocation2 + $0x60] sm:$0xff] %v2557
    %2608 = vst.msk [vmem:[#allocation2 + $0x68] sm:$0xff] %vm1719, %v2558
    %2609 = vst [vmem:[#allocation2 + $0x70] sm:$0xff] %v2559
    %2610 = vst.msk [vmem:[#allocation2 + $0x78] sm:$0xff] %vm1719, %v2560
    %2611 = vst [vmem:[#allocation2 + $0x80] sm:$0xff] %v2561
    %2612 = vst.msk [vmem:[#allocation2 + $0x88] sm:$0xff] %vm1719, %v2562
    %2613 = vst [vmem:[#allocation2 + $0x90] sm:$0xff] %v2563
    %2614 = vst.msk [vmem:[#allocation2 + $0x98] sm:$0xff] %vm1719, %v2564
    %2615 = vst [vmem:[#allocation2 + $0xa0] sm:$0xff] %v2565
    %2616 = vst.msk [vmem:[#allocation2 + $0xa8] sm:$0xff] %vm1719, %v2566
    %2617 = vst [vmem:[#allocation2 + $0xb0] sm:$0xff] %v2567
    %2618 = vst.msk [vmem:[#allocation2 + $0xb8] sm:$0xff] %vm1719, %v2568
    %2619 = vst [vmem:[#allocation2 + $0xc0] sm:$0xff] %v2569
    %2620 = vst.msk [vmem:[#allocation2 + $0xc8] sm:$0xff] %vm1719, %v2570
    %2621 = vst [vmem:[#allocation2 + $0xd0] sm:$0xff] %v2571
    %2622 = vst.msk [vmem:[#allocation2 + $0xd8] sm:$0xff] %vm1719, %v2572
    %2623 = vst [vmem:[#allocation2 + $0xe0] sm:$0xff] %v2573
    %2624 = vst.msk [vmem:[#allocation2 + $0xe8] sm:$0xff] %vm1719, %v2574
    %2625 = vst [vmem:[#allocation2 + $0xf0] sm:$0xff] %v2575
    %2626 = vst.msk [vmem:[#allocation2 + $0xf8] sm:$0xff] %vm1719, %v2576
    %2627 = vst [vmem:[#allocation2 + $0x100] sm:$0xff] %v2577
    %2628 = vst.msk [vmem:[#allocation2 + $0x108] sm:$0xff] %vm1719, %v2578
    %2629 = vst [vmem:[#allocation2 + $0x110] sm:$0xff] %v2579
    %2630 = vst.msk [vmem:[#allocation2 + $0x118] sm:$0xff] %vm1719, %v2580
    %2631 = vst [vmem:[#allocation2 + $0x120] sm:$0xff] %v2581
    %2632 = vst.msk [vmem:[#allocation2 + $0x128] sm:$0xff] %vm1719, %v2582
    %2633 = vst [vmem:[#allocation2 + $0x130] sm:$0xff] %v2583
    %2634 = vst.msk [vmem:[#allocation2 + $0x138] sm:$0xff] %vm1719, %v2584
    %2635 = vst [vmem:[#allocation2 + $0x140] sm:$0xff] %v2585
    %2636 = vst.msk [vmem:[#allocation2 + $0x148] sm:$0xff] %vm1719, %v2586
    %2637 = vst [vmem:[#allocation2 + $0x150] sm:$0xff] %v2587
    %2638 = vst.msk [vmem:[#allocation2 + $0x158] sm:$0xff] %vm1719, %v2588
    %2639 = vst [vmem:[#allocation2 + $0x160] sm:$0xff] %v2589
    %2640 = vst.msk [vmem:[#allocation2 + $0x168] sm:$0xff] %vm1719, %v2590
    %2641 = vst [vmem:[#allocation2 + $0x170] sm:$0xff] %v2591
    %2642 = vst.msk [vmem:[#allocation2 + $0x178] sm:$0xff] %vm1719, %v2592
    %2643 = vst [vmem:[#allocation2 + $0x180] sm:$0xff] %v2593
    %2644 = vst.msk [vmem:[#allocation2 + $0x188] sm:$0xff] %vm1719, %v2594
    // Predicated region
    $region18: #{tpu_custom_call.1} parent=1 // pred_check
      _
    $region19: #{tpu_custom_call.1} parent=1 // pred_check_branch
      %2646 = sbr.rel (0) target = $region21
    $region20: #{tpu_custom_call.1} parent=1 // pred_region
      %s2648 = ssub.s32 6400, 6400
      %2649 = vsyncadd [#allocation3], %s2648
      %s2650 = sshll.u32 [#allocation2], 4
      %s2651 = int_to_ptr.vmem [resolvable:$true] %s2650
      %2656 = dma.vmem_to_hbm [thread:$0]  %s2651, 6400, %s4, [#allocation3], 256, 256, 16
    $region21: #{tpu_custom_call.1} parent=1 // pred_fallthru
      _
    // Predicated region
    $region22: #{tpu_custom_call.1} parent=1 // pred_check
      _
    $region23: #{tpu_custom_call.1} parent=1 // pred_check_branch
      %2658 = sbr.rel (0) target = $region25
    $region24: #{tpu_custom_call.1} parent=1 // pred_region
      %2659 = dma.done [#allocation3], 6400
    $region25: #{tpu_custom_call.1} parent=1 // pred_fallthru
      _
    %2660 = vsyncpa [#allocation3], 1

</llo_original>
